<compile_context>
chip_gen: v5e
topology: v5e:2x2
jax: 0.10.0
libtpu: 0.0.40
codegen_flags: <defaults>
</compile_context>

<pallas_src>
import functools

import jax
import jax.numpy as jnp
from jax import lax
from jax.experimental import pallas as pl
from jax.experimental.pallas import tpu as pltpu

POSITIVE_LABEL = 1.0
NEGATIVE_LABEL = -1.0
FIXED_NEGATIVE_LABEL = -2.0

LANE_WIDTH = 640        # 128 anchors * 5 channels, channel-interleaved on the lane axis
MAX_BLOCK_ROWS = 256    # rows of 640 lanes per grid step (~0.64 MiB f32 per input block)
NQ = 16                 # accumulator rows (10 used), multiple of 8 sublanes
NUM_CORE_SPLITS = 2     # leading "parallel" grid axis (v7x megacore; harmless elsewhere)


def _loss_kernel(o_ref, l_ref, acc_ref, *, n_rows, block_rows, steps_per_core):
    """o_ref/l_ref: (block_rows, 640) f32 tiles; acc_ref: (16, 640) resident accumulator.

    Accumulator rows:
      0: pos BCE sum      1: pos count        2: pos correct
      3: neg BCE sum      4: neg count        5: neg correct
      6: fixed-neg BCE    7: fixed-neg count  8: fixed-neg correct
      9: SmoothL1 sums (per lane; channel = lane % 5 separates z/h/w/d at the end)
    """
    C = LANE_WIDTH
    p = pl.program_id(0)
    i = pl.program_id(1)

    @pl.when(i == 0)
    def _init():
        acc_ref[...] = jnp.zeros_like(acc_ref)

    # UNclamped global start row for this step (index_map clamps the DMA; we use the
    # unclamped value so duplicated / out-of-range blocks contribute exactly zero).
    start_row = (p * steps_per_core + i) * block_rows

    @pl.when(start_row < n_rows)
    def _compute():
        o = o_ref[...]                       # (block_rows, C) f32, channel = lane % 5
        l = l_ref[...]

        # Channel-0 lane mask (static repeating pattern), built without integer div/mod.
        lane_f = lax.broadcasted_iota(jnp.int32, (1, C), 1).astype(jnp.float32)
        is_ch0 = (jnp.floor(lane_f * 0.2 + 0.01) * 5.0) == lane_f            # (1, C)

        # Mask off rows past the true end of the data (partial last block, Pallas does
        # not zero-fill the out-of-bounds tail of the VMEM buffer).
        row_idx = lax.broadcasted_iota(jnp.int32, (block_rows, 1), 0)
        row_ok = (row_idx + start_row) < n_rows                              # (block_rows, 1)
        lane_ok = jnp.logical_and(is_ch0, row_ok)                            # (block_rows, C)

        is_pos = jnp.logical_and(l == POSITIVE_LABEL, lane_ok)
        is_neg = jnp.logical_and(l == NEGATIVE_LABEL, lane_ok)
        is_fng = jnp.logical_and(l == FIXED_NEGATIVE_LABEL, lane_ok)

        # BCE-with-logits, shared softplus:  BCE(x, t) = max(x,0) - x*t + log1p(exp(-|x|))
        softplus = jnp.log1p(jnp.exp(-jnp.abs(o)))
        bce0 = jnp.maximum(o, 0.0) + softplus          # target 0 (negatives)
        bce1 = bce0 - o                                # target 1 (positives)
        pred_pos = o >= 0.0                            # sigmoid(x) >= 0.5  <=>  x >= 0
        pred_neg = jnp.logical_not(pred_pos)

        pos_f = jnp.where(is_pos, 1.0, 0.0)
        neg_f = jnp.where(is_neg, 1.0, 0.0)
        fng_f = jnp.where(is_fng, 1.0, 0.0)

        def psum(x):                                   # per-lane partial sums -> (1, C)
            return jnp.sum(x, axis=0, keepdims=True)

        rows = [
            psum(jnp.where(is_pos, bce1, 0.0)),                                   # 0
            psum(pos_f),                                                          # 1
            psum(jnp.where(jnp.logical_and(is_pos, pred_pos), 1.0, 0.0)),         # 2
            psum(jnp.where(is_neg, bce0, 0.0)),                                   # 3
            psum(neg_f),                                                          # 4
            psum(jnp.where(jnp.logical_and(is_neg, pred_neg), 1.0, 0.0)),         # 5
            psum(jnp.where(is_fng, bce0, 0.0)),                                   # 6
            psum(fng_f),                                                          # 7
            psum(jnp.where(jnp.logical_and(is_fng, pred_neg), 1.0, 0.0)),         # 8
        ]

        # SmoothL1 (beta=1) on channels 1..4, gated by the anchor's positive flag.  The
        # flag lives on the channel-0 lane (5a); lane-rolls (XLU, cheap) spread it to the
        # anchor's channel lanes 5a+1..5a+4.  All four channel sums share one accumulator
        # row; they are separated by lane % 5 in the final JAX reduction.
        d = o - l
        ad = jnp.abs(d)
        sl1 = jnp.where(ad < 1.0, 0.5 * d * d, ad - 0.5)
        reg_mask = (pltpu.roll(pos_f, 1, axis=1) + pltpu.roll(pos_f, 2, axis=1)
                    + pltpu.roll(pos_f, 3, axis=1) + pltpu.roll(pos_f, 4, axis=1)) > 0.5
        rows.append(psum(jnp.where(reg_mask, sl1, 0.0)))                          # 9

        for q, part in enumerate(rows):
            acc_ref[q:q + 1, :] = acc_ref[q:q + 1, :] + part


def pallas_loss(output, labels, cls_weight=(0.5, 0.5, 0.2), reg_weight=1.0,
                num_hard_neg_per_patch=0):
    # TODO(synk): hard_mining (top-k over negatives when num_hard_neg_per_patch > 0) is a
    # data-dependent dynamic selection; only the module default (0) is implemented.
    assert num_hard_neg_per_patch == 0

    C = LANE_WIDTH
    o_flat = output.reshape(-1).astype(jnp.float32)
    l_flat = labels.reshape(-1).astype(jnp.float32)
    total = o_flat.shape[0]
    assert total % 5 == 0

    n_rows = pl.cdiv(total, C)
    padded = n_rows * C
    if padded != total:
        # TODO(synk): only hit when the anchor count is not a multiple of 128; a < 640
        # element alignment pad (still an XLA pad copy). The in-kernel row mask makes the
        # pad contents irrelevant.
        o_flat = jnp.pad(o_flat, (0, padded - total))
        l_flat = jnp.pad(l_flat, (0, padded - total))
    o2 = o_flat.reshape(n_rows, C)     # lane-dense, channel-interleaved (free reshape)
    l2 = l_flat.reshape(n_rows, C)

    block_rows = n_rows if n_rows <= MAX_BLOCK_ROWS else MAX_BLOCK_ROWS
    total_row_blocks = pl.cdiv(n_rows, block_rows)
    steps_per_core = pl.cdiv(total_row_blocks, NUM_CORE_SPLITS)

    def in_index_map(p, i):
        # Clamp so duplicated tail steps re-read the last (valid) block; the kernel's
        # unclamped row check makes them contribute zero.
        return (jnp.minimum(p * steps_per_core + i, total_row_blocks - 1), 0)

    kernel = functools.partial(_loss_kernel, n_rows=n_rows, block_rows=block_rows,
                               steps_per_core=steps_per_core)

    acc = pl.pallas_call(
        kernel,
        out_shape=jax.ShapeDtypeStruct((NUM_CORE_SPLITS * NQ, C), jnp.float32),
        grid=(NUM_CORE_SPLITS, steps_per_core),
        in_specs=[pl.BlockSpec((block_rows, C), in_index_map),
                  pl.BlockSpec((block_rows, C), in_index_map)],
        out_specs=pl.BlockSpec((NQ, C), lambda p, i: (p, 0)),
        compiler_params=pltpu.CompilerParams(
            dimension_semantics=("parallel", "arbitrary"),
            vmem_limit_bytes=32 * 1024 * 1024),
    )(o2, l2)

    # Final O(1) reduction in plain JAX: combine the two per-core partials, then reduce
    # the per-lane sums.
    acc = acc.reshape(NUM_CORE_SPLITS, NQ, C).sum(axis=0)        # (NQ, C)
    cls = jnp.sum(acc[0:9], axis=1)                              # 9 scalars
    pos_sum, pos_cnt, pos_cor = cls[0], cls[1], cls[2]
    neg_sum, neg_cnt, neg_cor = cls[3], cls[4], cls[5]
    fng_sum, fng_cnt, fng_cor = cls[6], cls[7], cls[8]
    reg_per_ch = jnp.sum(acc[9].reshape(C // 5, 5), axis=0)      # channel c at index c
    reg_sums = [reg_per_ch[c] for c in range(1, 5)]

    def safe_mean(s, c):
        # PyTorch branches skip empty selections (loss contribution 0)
        return jnp.where(c > 0, s / jnp.maximum(c, 1.0), 0.0)

    pos_loss = safe_mean(pos_sum, pos_cnt)
    neg_loss = safe_mean(neg_sum, neg_cnt)
    fng_loss = safe_mean(fng_sum, fng_cnt)
    reg_losses = [safe_mean(rs, pos_cnt) for rs in reg_sums]

    loss = (cls_weight[0] * pos_loss + cls_weight[1] * neg_loss
            + cls_weight[2] * fng_loss)
    for rl in reg_losses:
        loss = loss + reg_weight * rl

    return ([loss, pos_loss, neg_loss, fng_loss] + reg_losses
            + [pos_cor, pos_cnt, neg_cor, neg_cnt, fng_cor, fng_cnt])


def _reference_loss(output, labels, cls_weight=(0.5, 0.5, 0.2), reg_weight=1.0):
    # Pure-JAX reference (same masked-mean semantics) for the correctness check.
    o = output.reshape(-1, 5).astype(jnp.float32)
    l = labels.reshape(-1, 5).astype(jnp.float32)
    logit, lab0 = o[:, 0], l[:, 0]

    def bce(x, t):
        return jnp.maximum(x, 0.0) - x * t + jnp.log1p(jnp.exp(-jnp.abs(x)))

    def smooth_l1(d):
        ad = jnp.abs(d)
        return jnp.where(ad < 1.0, 0.5 * d * d, ad - 0.5)

    def masked_mean(vals, m):
        c = jnp.sum(m)
        return jnp.where(c > 0, jnp.sum(vals * m) / jnp.maximum(c, 1.0), 0.0), c

    pos_m = (lab0 == POSITIVE_LABEL).astype(jnp.float32)
    neg_m = (lab0 == NEGATIVE_LABEL).astype(jnp.float32)
    fng_m = (lab0 == FIXED_NEGATIVE_LABEL).astype(jnp.float32)
    pos_loss, pos_cnt = masked_mean(bce(logit, 1.0), pos_m)
    neg_loss, neg_cnt = masked_mean(bce(logit, 0.0), neg_m)
    fng_loss, fng_cnt = masked_mean(bce(logit, 0.0), fng_m)
    pos_cor = jnp.sum(pos_m * (logit >= 0.0))
    neg_cor = jnp.sum(neg_m * (logit < 0.0))
    fng_cor = jnp.sum(fng_m * (logit < 0.0))
    regs = []
    for c in range(4):
        r, _ = masked_mean(smooth_l1(o[:, c + 1] - l[:, c + 1]), pos_m)
        regs.append(r)
    loss = (cls_weight[0] * pos_loss + cls_weight[1] * neg_loss
            + cls_weight[2] * fng_loss + reg_weight * sum(regs))
    return ([loss, pos_loss, neg_loss, fng_loss] + regs
            + [pos_cor, pos_cnt, neg_cor, neg_cnt, fng_cor, fng_cnt])


if __name__ == "__main__":
    key = jax.random.PRNGKey(0)
    k1, k2, k3 = jax.random.split(key, 3)

    # Small shapes implied by the forward: (bt, z, h, w, a, 5); 256 anchors -> the
    # lane-dense (R, 640) view is a free reshape (no padding path).
    bt, z, h, w, a = 2, 2, 4, 4, 4
    output = jax.random.normal(k1, (bt, z, h, w, a, 5), dtype=jnp.float32)

    cls = jax.random.choice(
        k2,
        jnp.array([POSITIVE_LABEL, NEGATIVE_LABEL, FIXED_NEGATIVE_LABEL, 0.0],
                  dtype=jnp.float32),
        shape=(bt, z, h, w, a, 1),
        p=jnp.array([0.15, 0.6, 0.15, 0.10]))
    reg = jax.random.normal(k3, (bt, z, h, w, a, 4), dtype=jnp.float32)
    labels = jnp.concatenate([cls, reg], axis=-1)

    results = jax.jit(pallas_loss)(output, labels)
    results = [jax.block_until_ready(r) for r in results]

    ref = _reference_loss(output, labels)
    # Loss terms
    for got, want in zip(results[:8], ref[:8]):
        assert jnp.allclose(got, want, rtol=1e-4, atol=1e-5), (float(got), float(want))
    # Correct / total counts (exact)
    for got, want in zip(results[8:], ref[8:]):
        assert jnp.allclose(got, want), (float(got), float(want))

    print("KERNEL_OK")
</pallas_src>

<mosaic_0001>
module attributes {stable_mosaic.version = 11 : i64} {
  func.func @_loss_kernel(%arg0: i32, %arg1: i32, %arg2: memref<2x640xf32, #tpu.memory_space<vmem>>, %arg3: memref<2x640xf32, #tpu.memory_space<vmem>>, %arg4: memref<16x640xf32, #tpu.memory_space<vmem>>) attributes {dimension_semantics = [#tpu.dimension_semantics<parallel>, #tpu.dimension_semantics<arbitrary>], iteration_bounds = array<i64: 2, 1>, scalar_prefetch = 0 : i64, scratch_operands = 0 : i64, tpu.core_type = #tpu.core_type<tc>, window_params = [{transform_indices = @transform_0, window_bounds = array<i64: 2, 640>}, {transform_indices = @transform_1, window_bounds = array<i64: 2, 640>}, {transform_indices = @transform_2, window_bounds = array<i64: 16, 640>}]} {
    %c0_i32 = arith.constant 0 : i32
    %0 = arith.cmpi eq, %arg1, %c0_i32 : i32
    %1 = arith.extui %0 : i1 to i32
    %c0_i32_0 = arith.constant 0 : i32
    %2 = arith.cmpi ne, %1, %c0_i32_0 : i32
    scf.if %2 {
      %cst = arith.constant 0.000000e+00 : f32
      %9 = vector.broadcast %cst : f32 to vector<16x640xf32>
      %c0 = arith.constant 0 : index
      %c0_3 = arith.constant 0 : index
      %10 = vector.load %arg4[%c0, %c0_3] : memref<16x640xf32, #tpu.memory_space<vmem>>, vector<16x640xf32>
      tpu.vector_store %arg4[%c0, %c0_3], %9 {strides = array<i32>} : memref<16x640xf32, #tpu.memory_space<vmem>>, vector<16x640xf32>,
    } else {
    }
    %c1_i32 = arith.constant 1 : i32
    %3 = arith.muli %arg0, %c1_i32 : i32
    %4 = arith.addi %3, %arg1 : i32
    %c2_i32 = arith.constant 2 : i32
    %5 = arith.muli %4, %c2_i32 : i32
    %c2_i32_1 = arith.constant 2 : i32
    %6 = arith.cmpi slt, %5, %c2_i32_1 : i32
    %7 = arith.extui %6 : i1 to i32
    %c0_i32_2 = arith.constant 0 : i32
    %8 = arith.cmpi ne, %7, %c0_i32_2 : i32
    scf.if %8 {
      %c0 = arith.constant 0 : index
      %c0_3 = arith.constant 0 : index
      %9 = vector.load %arg2[%c0, %c0_3] : memref<2x640xf32, #tpu.memory_space<vmem>>, vector<2x640xf32>
      %c0_4 = arith.constant 0 : index
      %c0_5 = arith.constant 0 : index
      %10 = vector.load %arg3[%c0_4, %c0_5] : memref<2x640xf32, #tpu.memory_space<vmem>>, vector<2x640xf32>
      %11 = tpu.iota {dimensions = array<i32: 1>} : vector<1x640xi32>
      %12 = arith.sitofp %11 : vector<1x640xi32> to vector<1x640xf32>
      %cst = arith.constant 2.000000e-01 : f32
      %13 = vector.broadcast %cst : f32 to vector<1x640xf32>
      %14 = arith.mulf %12, %13 : vector<1x640xf32>
      %cst_6 = arith.constant 0.00999999977 : f32
      %15 = vector.broadcast %cst_6 : f32 to vector<1x640xf32>
      %16 = arith.addf %14, %15 : vector<1x640xf32>
      %17 = math.floor %16 : vector<1x640xf32>
      %cst_7 = arith.constant 5.000000e+00 : f32
      %18 = vector.broadcast %cst_7 : f32 to vector<1x640xf32>
      %19 = arith.mulf %17, %18 : vector<1x640xf32>
      %20 = arith.cmpf oeq, %19, %12 : vector<1x640xf32>
      %21 = tpu.iota {dimensions = array<i32: 0>} : vector<2x1xi32>
      %22 = vector.broadcast %5 : i32 to vector<2x1xi32>
      %23 = arith.addi %21, %22 : vector<2x1xi32>
      %c2_i32_8 = arith.constant 2 : i32
      %24 = vector.broadcast %c2_i32_8 : i32 to vector<2x1xi32>
      %25 = arith.cmpi slt, %23, %24 : vector<2x1xi32>
      %26 = vector.broadcast %20 : vector<1x640xi1> to vector<2x640xi1>
      %27 = vector.broadcast %25 : vector<2x1xi1> to vector<2x640xi1>
      %28 = arith.andi %26, %27 : vector<2x640xi1>
      %cst_9 = arith.constant 1.000000e+00 : f32
      %29 = vector.broadcast %cst_9 : f32 to vector<2x640xf32>
      %30 = arith.cmpf oeq, %10, %29 : vector<2x640xf32>
      %31 = arith.andi %30, %28 : vector<2x640xi1>
      %cst_10 = arith.constant -1.000000e+00 : f32
      %32 = vector.broadcast %cst_10 : f32 to vector<2x640xf32>
      %33 = arith.cmpf oeq, %10, %32 : vector<2x640xf32>
      %34 = arith.andi %33, %28 : vector<2x640xi1>
      %cst_11 = arith.constant -2.000000e+00 : f32
      %35 = vector.broadcast %cst_11 : f32 to vector<2x640xf32>
      %36 = arith.cmpf oeq, %10, %35 : vector<2x640xf32>
      %37 = arith.andi %36, %28 : vector<2x640xi1>
      %38 = math.absf %9 : vector<2x640xf32>
      %cst_12 = arith.constant 0.000000e+00 : f32
      %39 = vector.broadcast %cst_12 : f32 to vector<2x640xf32>
      %40 = arith.subf %39, %38 : vector<2x640xf32>
      %41 = math.exp %40 : vector<2x640xf32>
      %42 = math.log1p %41 : vector<2x640xf32>
      %cst_13 = arith.constant 0.000000e+00 : f32
      %43 = vector.broadcast %cst_13 : f32 to vector<2x640xf32>
      %44 = arith.maximumf %9, %43 : vector<2x640xf32>
      %45 = arith.addf %44, %42 : vector<2x640xf32>
      %46 = arith.subf %45, %9 : vector<2x640xf32>
      %cst_14 = arith.constant 0.000000e+00 : f32
      %47 = vector.broadcast %cst_14 : f32 to vector<2x640xf32>
      %48 = arith.cmpf oge, %9, %47 : vector<2x640xf32>
      %cst_15 = arith.constant dense<true> : vector<2x640xi1>
      %49 = arith.xori %48, %cst_15 : vector<2x640xi1>
      %cst_16 = arith.constant 1.000000e+00 : f32
      %cst_17 = arith.constant 0.000000e+00 : f32
      %50 = vector.broadcast %cst_16 : f32 to vector<2x640xf32>
      %51 = vector.broadcast %cst_17 : f32 to vector<2x640xf32>
      %52 = arith.select %31, %50, %51 : vector<2x640xi1>, vector<2x640xf32>
      %cst_18 = arith.constant 1.000000e+00 : f32
      %cst_19 = arith.constant 0.000000e+00 : f32
      %53 = vector.broadcast %cst_18 : f32 to vector<2x640xf32>
      %54 = vector.broadcast %cst_19 : f32 to vector<2x640xf32>
      %55 = arith.select %34, %53, %54 : vector<2x640xi1>, vector<2x640xf32>
      %cst_20 = arith.constant 1.000000e+00 : f32
      %cst_21 = arith.constant 0.000000e+00 : f32
      %56 = vector.broadcast %cst_20 : f32 to vector<2x640xf32>
      %57 = vector.broadcast %cst_21 : f32 to vector<2x640xf32>
      %58 = arith.select %37, %56, %57 : vector<2x640xi1>, vector<2x640xf32>
      %cst_22 = arith.constant 0.000000e+00 : f32
      %59 = vector.broadcast %cst_22 : f32 to vector<2x640xf32>
      %60 = arith.select %31, %46, %59 : vector<2x640xi1>, vector<2x640xf32>
      %cst_23 = arith.constant dense<0.000000e+00> : vector<640xf32>
      %61 = vector.multi_reduction <add>, %60, %cst_23 [0] : vector<2x640xf32> to vector<640xf32>
      %62 = vector.shape_cast %61 : vector<640xf32> to vector<1x640xf32>
      %cst_24 = arith.constant dense<0.000000e+00> : vector<640xf32>
      %63 = vector.multi_reduction <add>, %52, %cst_24 [0] : vector<2x640xf32> to vector<640xf32>
      %64 = vector.shape_cast %63 : vector<640xf32> to vector<1x640xf32>
      %65 = arith.andi %31, %48 : vector<2x640xi1>
      %cst_25 = arith.constant 1.000000e+00 : f32
      %cst_26 = arith.constant 0.000000e+00 : f32
      %66 = vector.broadcast %cst_25 : f32 to vector<2x640xf32>
      %67 = vector.broadcast %cst_26 : f32 to vector<2x640xf32>
      %68 = arith.select %65, %66, %67 : vector<2x640xi1>, vector<2x640xf32>
      %cst_27 = arith.constant dense<0.000000e+00> : vector<640xf32>
      %69 = vector.multi_reduction <add>, %68, %cst_27 [0] : vector<2x640xf32> to vector<640xf32>
      %70 = vector.shape_cast %69 : vector<640xf32> to vector<1x640xf32>
      %cst_28 = arith.constant 0.000000e+00 : f32
      %71 = vector.broadcast %cst_28 : f32 to vector<2x640xf32>
      %72 = arith.select %34, %45, %71 : vector<2x640xi1>, vector<2x640xf32>
      %cst_29 = arith.constant dense<0.000000e+00> : vector<640xf32>
      %73 = vector.multi_reduction <add>, %72, %cst_29 [0] : vector<2x640xf32> to vector<640xf32>
      %74 = vector.shape_cast %73 : vector<640xf32> to vector<1x640xf32>
      %cst_30 = arith.constant dense<0.000000e+00> : vector<640xf32>
      %75 = vector.multi_reduction <add>, %55, %cst_30 [0] : vector<2x640xf32> to vector<640xf32>
      %76 = vector.shape_cast %75 : vector<640xf32> to vector<1x640xf32>
      %77 = arith.andi %34, %49 : vector<2x640xi1>
      %cst_31 = arith.constant 1.000000e+00 : f32
      %cst_32 = arith.constant 0.000000e+00 : f32
      %78 = vector.broadcast %cst_31 : f32 to vector<2x640xf32>
      %79 = vector.broadcast %cst_32 : f32 to vector<2x640xf32>
      %80 = arith.select %77, %78, %79 : vector<2x640xi1>, vector<2x640xf32>
      %cst_33 = arith.constant dense<0.000000e+00> : vector<640xf32>
      %81 = vector.multi_reduction <add>, %80, %cst_33 [0] : vector<2x640xf32> to vector<640xf32>
      %82 = vector.shape_cast %81 : vector<640xf32> to vector<1x640xf32>
      %cst_34 = arith.constant 0.000000e+00 : f32
      %83 = vector.broadcast %cst_34 : f32 to vector<2x640xf32>
      %84 = arith.select %37, %45, %83 : vector<2x640xi1>, vector<2x640xf32>
      %cst_35 = arith.constant dense<0.000000e+00> : vector<640xf32>
      %85 = vector.multi_reduction <add>, %84, %cst_35 [0] : vector<2x640xf32> to vector<640xf32>
      %86 = vector.shape_cast %85 : vector<640xf32> to vector<1x640xf32>
      %cst_36 = arith.constant dense<0.000000e+00> : vector<640xf32>
      %87 = vector.multi_reduction <add>, %58, %cst_36 [0] : vector<2x640xf32> to vector<640xf32>
      %88 = vector.shape_cast %87 : vector<640xf32> to vector<1x640xf32>
      %89 = arith.andi %37, %49 : vector<2x640xi1>
      %cst_37 = arith.constant 1.000000e+00 : f32
      %cst_38 = arith.constant 0.000000e+00 : f32
      %90 = vector.broadcast %cst_37 : f32 to vector<2x640xf32>
      %91 = vector.broadcast %cst_38 : f32 to vector<2x640xf32>
      %92 = arith.select %89, %90, %91 : vector<2x640xi1>, vector<2x640xf32>
      %cst_39 = arith.constant dense<0.000000e+00> : vector<640xf32>
      %93 = vector.multi_reduction <add>, %92, %cst_39 [0] : vector<2x640xf32> to vector<640xf32>
      %94 = vector.shape_cast %93 : vector<640xf32> to vector<1x640xf32>
      %95 = arith.subf %9, %10 : vector<2x640xf32>
      %96 = math.absf %95 : vector<2x640xf32>
      %cst_40 = arith.constant 1.000000e+00 : f32
      %97 = vector.broadcast %cst_40 : f32 to vector<2x640xf32>
      %98 = arith.cmpf olt, %96, %97 : vector<2x640xf32>
      %cst_41 = arith.constant 5.000000e-01 : f32
      %99 = vector.broadcast %cst_41 : f32 to vector<2x640xf32>
      %100 = arith.mulf %99, %95 : vector<2x640xf32>
      %101 = arith.mulf %100, %95 : vector<2x640xf32>
      %cst_42 = arith.constant 5.000000e-01 : f32
      %102 = vector.broadcast %cst_42 : f32 to vector<2x640xf32>
      %103 = arith.subf %96, %102 : vector<2x640xf32>
      %104 = arith.select %98, %101, %103 : vector<2x640xi1>, vector<2x640xf32>
      %c1_i32_43 = arith.constant 1 : i32
      %105 = tpu.dynamic_rotate %52 by %c1_i32_43 dim 1 : vector<2x640xf32>, i32 -> vector<2x640xf32>
      %c2_i32_44 = arith.constant 2 : i32
      %106 = tpu.dynamic_rotate %52 by %c2_i32_44 dim 1 : vector<2x640xf32>, i32 -> vector<2x640xf32>
      %107 = arith.addf %105, %106 : vector<2x640xf32>
      %c3_i32 = arith.constant 3 : i32
      %108 = tpu.dynamic_rotate %52 by %c3_i32 dim 1 : vector<2x640xf32>, i32 -> vector<2x640xf32>
      %109 = arith.addf %107, %108 : vector<2x640xf32>
      %c4_i32 = arith.constant 4 : i32
      %110 = tpu.dynamic_rotate %52 by %c4_i32 dim 1 : vector<2x640xf32>, i32 -> vector<2x640xf32>
      %111 = arith.addf %109, %110 : vector<2x640xf32>
      %cst_45 = arith.constant 5.000000e-01 : f32
      %112 = vector.broadcast %cst_45 : f32 to vector<2x640xf32>
      %113 = arith.cmpf ogt, %111, %112 : vector<2x640xf32>
      %cst_46 = arith.constant 0.000000e+00 : f32
      %114 = vector.broadcast %cst_46 : f32 to vector<2x640xf32>
      %115 = arith.select %113, %104, %114 : vector<2x640xi1>, vector<2x640xf32>
      %cst_47 = arith.constant dense<0.000000e+00> : vector<640xf32>
      %116 = vector.multi_reduction <add>, %115, %cst_47 [0] : vector<2x640xf32> to vector<640xf32>
      %117 = vector.shape_cast %116 : vector<640xf32> to vector<1x640xf32>
      %c0_48 = arith.constant 0 : index
      %c0_49 = arith.constant 0 : index
      %118 = vector.load %arg4[%c0_48, %c0_49] : memref<16x640xf32, #tpu.memory_space<vmem>>, vector<1x640xf32>
      %119 = arith.addf %118, %62 : vector<1x640xf32>
      %c0_50 = arith.constant 0 : index
      %c0_51 = arith.constant 0 : index
      %120 = vector.load %arg4[%c0_50, %c0_51] : memref<16x640xf32, #tpu.memory_space<vmem>>, vector<1x640xf32>
      tpu.vector_store %arg4[%c0_50, %c0_51], %119 {strides = array<i32>} : memref<16x640xf32, #tpu.memory_space<vmem>>, vector<1x640xf32>,
      %c1 = arith.constant 1 : index
      %c0_52 = arith.constant 0 : index
      %121 = vector.load %arg4[%c1, %c0_52] : memref<16x640xf32, #tpu.memory_space<vmem>>, vector<1x640xf32>
      %122 = arith.addf %121, %64 : vector<1x640xf32>
      %c1_53 = arith.constant 1 : index
      %c0_54 = arith.constant 0 : index
      %123 = vector.load %arg4[%c1_53, %c0_54] : memref<16x640xf32, #tpu.memory_space<vmem>>, vector<1x640xf32>
      tpu.vector_store %arg4[%c1_53, %c0_54], %122 {strides = array<i32>} : memref<16x640xf32, #tpu.memory_space<vmem>>, vector<1x640xf32>,
      %c2 = arith.constant 2 : index
      %c0_55 = arith.constant 0 : index
      %124 = vector.load %arg4[%c2, %c0_55] : memref<16x640xf32, #tpu.memory_space<vmem>>, vector<1x640xf32>
      %125 = arith.addf %124, %70 : vector<1x640xf32>
      %c2_56 = arith.constant 2 : index
      %c0_57 = arith.constant 0 : index
      %126 = vector.load %arg4[%c2_56, %c0_57] : memref<16x640xf32, #tpu.memory_space<vmem>>, vector<1x640xf32>
      tpu.vector_store %arg4[%c2_56, %c0_57], %125 {strides = array<i32>} : memref<16x640xf32, #tpu.memory_space<vmem>>, vector<1x640xf32>,
      %c3 = arith.constant 3 : index
      %c0_58 = arith.constant 0 : index
      %127 = vector.load %arg4[%c3, %c0_58] : memref<16x640xf32, #tpu.memory_space<vmem>>, vector<1x640xf32>
      %128 = arith.addf %127, %74 : vector<1x640xf32>
      %c3_59 = arith.constant 3 : index
      %c0_60 = arith.constant 0 : index
      %129 = vector.load %arg4[%c3_59, %c0_60] : memref<16x640xf32, #tpu.memory_space<vmem>>, vector<1x640xf32>
      tpu.vector_store %arg4[%c3_59, %c0_60], %128 {strides = array<i32>} : memref<16x640xf32, #tpu.memory_space<vmem>>, vector<1x640xf32>,
      %c4 = arith.constant 4 : index
      %c0_61 = arith.constant 0 : index
      %130 = vector.load %arg4[%c4, %c0_61] : memref<16x640xf32, #tpu.memory_space<vmem>>, vector<1x640xf32>
      %131 = arith.addf %130, %76 : vector<1x640xf32>
      %c4_62 = arith.constant 4 : index
      %c0_63 = arith.constant 0 : index
      %132 = vector.load %arg4[%c4_62, %c0_63] : memref<16x640xf32, #tpu.memory_space<vmem>>, vector<1x640xf32>
      tpu.vector_store %arg4[%c4_62, %c0_63], %131 {strides = array<i32>} : memref<16x640xf32, #tpu.memory_space<vmem>>, vector<1x640xf32>,
      %c5 = arith.constant 5 : index
      %c0_64 = arith.constant 0 : index
      %133 = vector.load %arg4[%c5, %c0_64] : memref<16x640xf32, #tpu.memory_space<vmem>>, vector<1x640xf32>
      %134 = arith.addf %133, %82 : vector<1x640xf32>
      %c5_65 = arith.constant 5 : index
      %c0_66 = arith.constant 0 : index
      %135 = vector.load %arg4[%c5_65, %c0_66] : memref<16x640xf32, #tpu.memory_space<vmem>>, vector<1x640xf32>
      tpu.vector_store %arg4[%c5_65, %c0_66], %134 {strides = array<i32>} : memref<16x640xf32, #tpu.memory_space<vmem>>, vector<1x640xf32>,
      %c6 = arith.constant 6 : index
      %c0_67 = arith.constant 0 : index
      %136 = vector.load %arg4[%c6, %c0_67] : memref<16x640xf32, #tpu.memory_space<vmem>>, vector<1x640xf32>
      %137 = arith.addf %136, %86 : vector<1x640xf32>
      %c6_68 = arith.constant 6 : index
      %c0_69 = arith.constant 0 : index
      %138 = vector.load %arg4[%c6_68, %c0_69] : memref<16x640xf32, #tpu.memory_space<vmem>>, vector<1x640xf32>
      tpu.vector_store %arg4[%c6_68, %c0_69], %137 {strides = array<i32>} : memref<16x640xf32, #tpu.memory_space<vmem>>, vector<1x640xf32>,
      %c7 = arith.constant 7 : index
      %c0_70 = arith.constant 0 : index
      %139 = vector.load %arg4[%c7, %c0_70] : memref<16x640xf32, #tpu.memory_space<vmem>>, vector<1x640xf32>
      %140 = arith.addf %139, %88 : vector<1x640xf32>
      %c7_71 = arith.constant 7 : index
      %c0_72 = arith.constant 0 : index
      %141 = vector.load %arg4[%c7_71, %c0_72] : memref<16x640xf32, #tpu.memory_space<vmem>>, vector<1x640xf32>
      tpu.vector_store %arg4[%c7_71, %c0_72], %140 {strides = array<i32>} : memref<16x640xf32, #tpu.memory_space<vmem>>, vector<1x640xf32>,
      %c8 = arith.constant 8 : index
      %c0_73 = arith.constant 0 : index
      %142 = vector.load %arg4[%c8, %c0_73] : memref<16x640xf32, #tpu.memory_space<vmem>>, vector<1x640xf32>
      %143 = arith.addf %142, %94 : vector<1x640xf32>
      %c8_74 = arith.constant 8 : index
      %c0_75 = arith.constant 0 : index
      %144 = vector.load %arg4[%c8_74, %c0_75] : memref<16x640xf32, #tpu.memory_space<vmem>>, vector<1x640xf32>
      tpu.vector_store %arg4[%c8_74, %c0_75], %143 {strides = array<i32>} : memref<16x640xf32, #tpu.memory_space<vmem>>, vector<1x640xf32>,
      %c9 = arith.constant 9 : index
      %c0_76 = arith.constant 0 : index
      %145 = vector.load %arg4[%c9, %c0_76] : memref<16x640xf32, #tpu.memory_space<vmem>>, vector<1x640xf32>
      %146 = arith.addf %145, %117 : vector<1x640xf32>
      %c9_77 = arith.constant 9 : index
      %c0_78 = arith.constant 0 : index
      %147 = vector.load %arg4[%c9_77, %c0_78] : memref<16x640xf32, #tpu.memory_space<vmem>>, vector<1x640xf32>
      tpu.vector_store %arg4[%c9_77, %c0_78], %146 {strides = array<i32>} : memref<16x640xf32, #tpu.memory_space<vmem>>, vector<1x640xf32>,
    } else {
    }
    return
  }
  func.func @transform_0(%arg0: i32, %arg1: i32) -> (i32, i32) {
    %c1_i32 = arith.constant 1 : i32
    %0 = arith.muli %arg0, %c1_i32 : i32
    %1 = arith.addi %0, %arg1 : i32
    %c0_i32 = arith.constant 0 : i32
    %2 = arith.minsi %1, %c0_i32 : i32
    %c0_i32_0 = arith.constant 0 : i32
    %c0_i32_1 = arith.constant 0 : i32
    return %2, %c0_i32_0 : i32, i32
  }
  func.func @transform_1(%arg0: i32, %arg1: i32) -> (i32, i32) {
    %c1_i32 = arith.constant 1 : i32
    %0 = arith.muli %arg0, %c1_i32 : i32
    %1 = arith.addi %0, %arg1 : i32
    %c0_i32 = arith.constant 0 : i32
    %2 = arith.minsi %1, %c0_i32 : i32
    %c0_i32_0 = arith.constant 0 : i32
    %c0_i32_1 = arith.constant 0 : i32
    return %2, %c0_i32_0 : i32, i32
  }
  func.func @transform_2(%arg0: i32, %arg1: i32) -> (i32, i32) {
    %c0_i32 = arith.constant 0 : i32
    %c0_i32_0 = arith.constant 0 : i32
    return %arg0, %c0_i32 : i32, i32
  }
}

</mosaic_0001>

<llo_original>
// kernel: squeeze.23
$region0: #{squeeze.23}
  %s0 = inlined_call_operand.vmem [shape: f32[640], index: 0, kind: input, shape index: {}]
  %s1 = inlined_call_operand.vmem [shape: f32[128,5], index: 1, kind: output, shape index: {}]
  %v2 = vld [vmem:[%s0] sm:$0x1]
  %vm3 = vcmask 39936
  %4 = vst.msk [vmem:[%s1] sm:$0x1] %vm3, %v2
  %s5 = scalar_lea.vmem %s0, 3
  %v6 = vld [vmem:[%s5] sm:$0x1]
  %7 = vrot.lane.b32.xlu0 %v6, 127
  %v8 = vpop.permute.xlu0 %7
  %vm9 = vcmask 39936
  %s10 = scalar_lea.vmem %s1, 77
  %11 = vst.msk [vmem:[%s10] sm:$0x1] %vm9, %v8
  %s12 = scalar_lea.vmem %s0, 1
  %v13 = vld [vmem:[%s12] sm:$0x1]
  %14 = vrot.lane.b32.xlu0 %v13, 126
  %v15 = vpop.permute.xlu0 %14
  %vm16 = vcmask 39936
  %s17 = scalar_lea.vmem %s1, 26
  %18 = vst.msk [vmem:[%s17] sm:$0x1] %vm16, %v15
  %s19 = scalar_lea.vmem %s0, 4
  %v20 = vld [vmem:[%s19] sm:$0x1]
  %21 = vrot.lane.b32.xlu0 %v20, 125
  %v22 = vpop.permute.xlu0 %21
  %vm23 = vcmask 39936
  %s24 = scalar_lea.vmem %s1, 103
  %25 = vst.msk [vmem:[%s24] sm:$0x1] %vm23, %v22
  %s26 = scalar_lea.vmem %s0, 2
  %v27 = vld [vmem:[%s26] sm:$0x1]
  %28 = vrot.lane.b32.xlu0 %v27, 124
  %v29 = vpop.permute.xlu0 %28
  %vm30 = vcmask 39936
  %s31 = scalar_lea.vmem %s1, 52
  %32 = vst.msk [vmem:[%s31] sm:$0x1] %vm30, %v29
  %v33 = vld [vmem:[%s0] sm:$0x1]
  %34 = vrot.lane.b32.xlu0 %v33, 123
  %v35 = vpop.permute.xlu0 %34
  %vm36 = vcmask 39936
  %s37 = scalar_lea.vmem %s1, 1
  %38 = vst.msk [vmem:[%s37] sm:$0x1] %vm36, %v35
  %s39 = scalar_lea.vmem %s0, 3
  %v40 = vld [vmem:[%s39] sm:$0x1]
  %41 = vrot.lane.b32.xlu0 %v40, 122
  %v42 = vpop.permute.xlu0 %41
  %vm43 = vcmask 39936
  %s44 = scalar_lea.vmem %s1, 78
  %45 = vst.msk [vmem:[%s44] sm:$0x1] %vm43, %v42
  %s46 = scalar_lea.vmem %s0, 1
  %v47 = vld [vmem:[%s46] sm:$0x1]
  %48 = vrot.lane.b32.xlu0 %v47, 121
  %v49 = vpop.permute.xlu0 %48
  %vm50 = vcmask 39936
  %s51 = scalar_lea.vmem %s1, 27
  %52 = vst.msk [vmem:[%s51] sm:$0x1] %vm50, %v49
  %s53 = scalar_lea.vmem %s0, 4
  %v54 = vld [vmem:[%s53] sm:$0x1]
  %55 = vrot.lane.b32.xlu0 %v54, 120
  %v56 = vpop.permute.xlu0 %55
  %vm57 = vcmask 39936
  %s58 = scalar_lea.vmem %s1, 104
  %59 = vst.msk [vmem:[%s58] sm:$0x1] %vm57, %v56
  %s60 = scalar_lea.vmem %s0, 2
  %v61 = vld [vmem:[%s60] sm:$0x1]
  %62 = vrot.lane.b32.xlu0 %v61, 119
  %v63 = vpop.permute.xlu0 %62
  %vm64 = vcmask 39936
  %s65 = scalar_lea.vmem %s1, 53
  %66 = vst.msk [vmem:[%s65] sm:$0x1] %vm64, %v63
  %v67 = vld [vmem:[%s0] sm:$0x1]
  %68 = vrot.lane.b32.xlu0 %v67, 118
  %v69 = vpop.permute.xlu0 %68
  %vm70 = vcmask 39936
  %s71 = scalar_lea.vmem %s1, 2
  %72 = vst.msk [vmem:[%s71] sm:$0x1] %vm70, %v69
  %s73 = scalar_lea.vmem %s0, 3
  %v74 = vld [vmem:[%s73] sm:$0x1]
  %75 = vrot.lane.b32.xlu0 %v74, 117
  %v76 = vpop.permute.xlu0 %75
  %vm77 = vcmask 39936
  %s78 = scalar_lea.vmem %s1, 79
  %79 = vst.msk [vmem:[%s78] sm:$0x1] %vm77, %v76
  %s80 = scalar_lea.vmem %s0, 1
  %v81 = vld [vmem:[%s80] sm:$0x1]
  %82 = vrot.lane.b32.xlu0 %v81, 116
  %v83 = vpop.permute.xlu0 %82
  %vm84 = vcmask 39936
  %s85 = scalar_lea.vmem %s1, 28
  %86 = vst.msk [vmem:[%s85] sm:$0x1] %vm84, %v83
  %s87 = scalar_lea.vmem %s0, 4
  %v88 = vld [vmem:[%s87] sm:$0x1]
  %89 = vrot.lane.b32.xlu0 %v88, 115
  %v90 = vpop.permute.xlu0 %89
  %vm91 = vcmask 39936
  %s92 = scalar_lea.vmem %s1, 105
  %93 = vst.msk [vmem:[%s92] sm:$0x1] %vm91, %v90
  %s94 = scalar_lea.vmem %s0, 2
  %v95 = vld [vmem:[%s94] sm:$0x1]
  %96 = vrot.lane.b32.xlu0 %v95, 114
  %v97 = vpop.permute.xlu0 %96
  %vm98 = vcmask 39936
  %s99 = scalar_lea.vmem %s1, 54
  %100 = vst.msk [vmem:[%s99] sm:$0x1] %vm98, %v97
  %v101 = vld [vmem:[%s0] sm:$0x1]
  %102 = vrot.lane.b32.xlu0 %v101, 113
  %v103 = vpop.permute.xlu0 %102
  %vm104 = vcmask 39936
  %s105 = scalar_lea.vmem %s1, 3
  %106 = vst.msk [vmem:[%s105] sm:$0x1] %vm104, %v103
  %s107 = scalar_lea.vmem %s0, 3
  %v108 = vld [vmem:[%s107] sm:$0x1]
  %109 = vrot.lane.b32.xlu0 %v108, 112
  %v110 = vpop.permute.xlu0 %109
  %vm111 = vcmask 39936
  %s112 = scalar_lea.vmem %s1, 80
  %113 = vst.msk [vmem:[%s112] sm:$0x1] %vm111, %v110
  %s114 = scalar_lea.vmem %s0, 1
  %v115 = vld [vmem:[%s114] sm:$0x1]
  %116 = vrot.lane.b32.xlu0 %v115, 111
  %v117 = vpop.permute.xlu0 %116
  %vm118 = vcmask 39936
  %s119 = scalar_lea.vmem %s1, 29
  %120 = vst.msk [vmem:[%s119] sm:$0x1] %vm118, %v117
  %s121 = scalar_lea.vmem %s0, 4
  %v122 = vld [vmem:[%s121] sm:$0x1]
  %123 = vrot.lane.b32.xlu0 %v122, 110
  %v124 = vpop.permute.xlu0 %123
  %vm125 = vcmask 39936
  %s126 = scalar_lea.vmem %s1, 106
  %127 = vst.msk [vmem:[%s126] sm:$0x1] %vm125, %v124
  %s128 = scalar_lea.vmem %s0, 2
  %v129 = vld [vmem:[%s128] sm:$0x1]
  %130 = vrot.lane.b32.xlu0 %v129, 109
  %v131 = vpop.permute.xlu0 %130
  %vm132 = vcmask 39936
  %s133 = scalar_lea.vmem %s1, 55
  %134 = vst.msk [vmem:[%s133] sm:$0x1] %vm132, %v131
  %v135 = vld [vmem:[%s0] sm:$0x1]
  %136 = vrot.lane.b32.xlu0 %v135, 108
  %v137 = vpop.permute.xlu0 %136
  %vm138 = vcmask 39936
  %s139 = scalar_lea.vmem %s1, 4
  %140 = vst.msk [vmem:[%s139] sm:$0x1] %vm138, %v137
  %s141 = scalar_lea.vmem %s0, 3
  %v142 = vld [vmem:[%s141] sm:$0x1]
  %143 = vrot.lane.b32.xlu0 %v142, 107
  %v144 = vpop.permute.xlu0 %143
  %vm145 = vcmask 39936
  %s146 = scalar_lea.vmem %s1, 81
  %147 = vst.msk [vmem:[%s146] sm:$0x1] %vm145, %v144
  %s148 = scalar_lea.vmem %s0, 1
  %v149 = vld [vmem:[%s148] sm:$0x1]
  %150 = vrot.lane.b32.xlu0 %v149, 106
  %v151 = vpop.permute.xlu0 %150
  %vm152 = vcmask 39936
  %s153 = scalar_lea.vmem %s1, 30
  %154 = vst.msk [vmem:[%s153] sm:$0x1] %vm152, %v151
  %s155 = scalar_lea.vmem %s0, 4
  %v156 = vld [vmem:[%s155] sm:$0x1]
  %157 = vrot.lane.b32.xlu0 %v156, 105
  %v158 = vpop.permute.xlu0 %157
  %vm159 = vcmask 39936
  %s160 = scalar_lea.vmem %s1, 107
  %161 = vst.msk [vmem:[%s160] sm:$0x1] %vm159, %v158
  %s162 = scalar_lea.vmem %s0, 2
  %v163 = vld [vmem:[%s162] sm:$0x1]
  %164 = vrot.lane.b32.xlu0 %v163, 104
  %v165 = vpop.permute.xlu0 %164
  %vm166 = vcmask 39936
  %s167 = scalar_lea.vmem %s1, 56
  %168 = vst.msk [vmem:[%s167] sm:$0x1] %vm166, %v165
  %v169 = vld [vmem:[%s0] sm:$0x1]
  %170 = vrot.lane.b32.xlu0 %v169, 103
  %v171 = vpop.permute.xlu0 %170
  %vm172 = vcmask 39936
  %s173 = scalar_lea.vmem %s1, 5
  %174 = vst.msk [vmem:[%s173] sm:$0x1] %vm172, %v171
  %s175 = scalar_lea.vmem %s0, 3
  %v176 = vld [vmem:[%s175] sm:$0x1]
  %177 = vrot.lane.b32.xlu0 %v176, 102
  %v178 = vpop.permute.xlu0 %177
  %vm179 = vcmask 39936
  %s180 = scalar_lea.vmem %s1, 82
  %181 = vst.msk [vmem:[%s180] sm:$0x1] %vm179, %v178
  %s182 = scalar_lea.vmem %s0, 1
  %v183 = vld [vmem:[%s182] sm:$0x1]
  %184 = vrot.lane.b32.xlu0 %v183, 101
  %v185 = vpop.permute.xlu0 %184
  %vm186 = vcmask 39936
  %s187 = scalar_lea.vmem %s1, 31
  %188 = vst.msk [vmem:[%s187] sm:$0x1] %vm186, %v185
  %s189 = scalar_lea.vmem %s0, 4
  %v190 = vld [vmem:[%s189] sm:$0x1]
  %191 = vrot.lane.b32.xlu0 %v190, 100
  %v192 = vpop.permute.xlu0 %191
  %vm193 = vcmask 39936
  %s194 = scalar_lea.vmem %s1, 108
  %195 = vst.msk [vmem:[%s194] sm:$0x1] %vm193, %v192
  %s196 = scalar_lea.vmem %s0, 2
  %v197 = vld [vmem:[%s196] sm:$0x1]
  %198 = vrot.lane.b32.xlu0 %v197, 99
  %v199 = vpop.permute.xlu0 %198
  %vm200 = vcmask 39936
  %s201 = scalar_lea.vmem %s1, 57
  %202 = vst.msk [vmem:[%s201] sm:$0x1] %vm200, %v199
  %v203 = vld [vmem:[%s0] sm:$0x1]
  %204 = vrot.lane.b32.xlu0 %v203, 98
  %v205 = vpop.permute.xlu0 %204
  %vm206 = vcmask 39936
  %s207 = scalar_lea.vmem %s1, 6
  %208 = vst.msk [vmem:[%s207] sm:$0x1] %vm206, %v205
  %s209 = scalar_lea.vmem %s0, 3
  %v210 = vld [vmem:[%s209] sm:$0x1]
  %211 = vrot.lane.b32.xlu0 %v210, 97
  %v212 = vpop.permute.xlu0 %211
  %vm213 = vcmask 39936
  %s214 = scalar_lea.vmem %s1, 83
  %215 = vst.msk [vmem:[%s214] sm:$0x1] %vm213, %v212
  %s216 = scalar_lea.vmem %s0, 1
  %v217 = vld [vmem:[%s216] sm:$0x1]
  %218 = vrot.lane.b32.xlu0 %v217, 96
  %v219 = vpop.permute.xlu0 %218
  %vm220 = vcmask 39936
  %s221 = scalar_lea.vmem %s1, 32
  %222 = vst.msk [vmem:[%s221] sm:$0x1] %vm220, %v219
  %s223 = scalar_lea.vmem %s0, 4
  %v224 = vld [vmem:[%s223] sm:$0x1]
  %225 = vrot.lane.b32.xlu0 %v224, 95
  %v226 = vpop.permute.xlu0 %225
  %vm227 = vcmask 39936
  %s228 = scalar_lea.vmem %s1, 109
  %229 = vst.msk [vmem:[%s228] sm:$0x1] %vm227, %v226
  %s230 = scalar_lea.vmem %s0, 2
  %v231 = vld [vmem:[%s230] sm:$0x1]
  %232 = vrot.lane.b32.xlu0 %v231, 94
  %v233 = vpop.permute.xlu0 %232
  %vm234 = vcmask 39936
  %s235 = scalar_lea.vmem %s1, 58
  %236 = vst.msk [vmem:[%s235] sm:$0x1] %vm234, %v233
  %v237 = vld [vmem:[%s0] sm:$0x1]
  %238 = vrot.lane.b32.xlu0 %v237, 93
  %v239 = vpop.permute.xlu0 %238
  %vm240 = vcmask 39936
  %s241 = scalar_lea.vmem %s1, 7
  %242 = vst.msk [vmem:[%s241] sm:$0x1] %vm240, %v239
  %s243 = scalar_lea.vmem %s0, 3
  %v244 = vld [vmem:[%s243] sm:$0x1]
  %245 = vrot.lane.b32.xlu0 %v244, 92
  %v246 = vpop.permute.xlu0 %245
  %vm247 = vcmask 39936
  %s248 = scalar_lea.vmem %s1, 84
  %249 = vst.msk [vmem:[%s248] sm:$0x1] %vm247, %v246
  %s250 = scalar_lea.vmem %s0, 1
  %v251 = vld [vmem:[%s250] sm:$0x1]
  %252 = vrot.lane.b32.xlu0 %v251, 91
  %v253 = vpop.permute.xlu0 %252
  %vm254 = vcmask 39936
  %s255 = scalar_lea.vmem %s1, 33
  %256 = vst.msk [vmem:[%s255] sm:$0x1] %vm254, %v253
  %s257 = scalar_lea.vmem %s0, 4
  %v258 = vld [vmem:[%s257] sm:$0x1]
  %259 = vrot.lane.b32.xlu0 %v258, 90
  %v260 = vpop.permute.xlu0 %259
  %vm261 = vcmask 39936
  %s262 = scalar_lea.vmem %s1, 110
  %263 = vst.msk [vmem:[%s262] sm:$0x1] %vm261, %v260
  %s264 = scalar_lea.vmem %s0, 2
  %v265 = vld [vmem:[%s264] sm:$0x1]
  %266 = vrot.lane.b32.xlu0 %v265, 89
  %v267 = vpop.permute.xlu0 %266
  %vm268 = vcmask 39936
  %s269 = scalar_lea.vmem %s1, 59
  %270 = vst.msk [vmem:[%s269] sm:$0x1] %vm268, %v267
  %v271 = vld [vmem:[%s0] sm:$0x1]
  %272 = vrot.lane.b32.xlu0 %v271, 88
  %v273 = vpop.permute.xlu0 %272
  %vm274 = vcmask 39936
  %s275 = scalar_lea.vmem %s1, 8
  %276 = vst.msk [vmem:[%s275] sm:$0x1] %vm274, %v273
  %s277 = scalar_lea.vmem %s0, 3
  %v278 = vld [vmem:[%s277] sm:$0x1]
  %279 = vrot.lane.b32.xlu0 %v278, 87
  %v280 = vpop.permute.xlu0 %279
  %vm281 = vcmask 39936
  %s282 = scalar_lea.vmem %s1, 85
  %283 = vst.msk [vmem:[%s282] sm:$0x1] %vm281, %v280
  %s284 = scalar_lea.vmem %s0, 1
  %v285 = vld [vmem:[%s284] sm:$0x1]
  %286 = vrot.lane.b32.xlu0 %v285, 86
  %v287 = vpop.permute.xlu0 %286
  %vm288 = vcmask 39936
  %s289 = scalar_lea.vmem %s1, 34
  %290 = vst.msk [vmem:[%s289] sm:$0x1] %vm288, %v287
  %s291 = scalar_lea.vmem %s0, 4
  %v292 = vld [vmem:[%s291] sm:$0x1]
  %293 = vrot.lane.b32.xlu0 %v292, 85
  %v294 = vpop.permute.xlu0 %293
  %vm295 = vcmask 39936
  %s296 = scalar_lea.vmem %s1, 111
  %297 = vst.msk [vmem:[%s296] sm:$0x1] %vm295, %v294
  %s298 = scalar_lea.vmem %s0, 2
  %v299 = vld [vmem:[%s298] sm:$0x1]
  %300 = vrot.lane.b32.xlu0 %v299, 84
  %v301 = vpop.permute.xlu0 %300
  %vm302 = vcmask 39936
  %s303 = scalar_lea.vmem %s1, 60
  %304 = vst.msk [vmem:[%s303] sm:$0x1] %vm302, %v301
  %v305 = vld [vmem:[%s0] sm:$0x1]
  %306 = vrot.lane.b32.xlu0 %v305, 83
  %v307 = vpop.permute.xlu0 %306
  %vm308 = vcmask 39936
  %s309 = scalar_lea.vmem %s1, 9
  %310 = vst.msk [vmem:[%s309] sm:$0x1] %vm308, %v307
  %s311 = scalar_lea.vmem %s0, 3
  %v312 = vld [vmem:[%s311] sm:$0x1]
  %313 = vrot.lane.b32.xlu0 %v312, 82
  %v314 = vpop.permute.xlu0 %313
  %vm315 = vcmask 39936
  %s316 = scalar_lea.vmem %s1, 86
  %317 = vst.msk [vmem:[%s316] sm:$0x1] %vm315, %v314
  %s318 = scalar_lea.vmem %s0, 1
  %v319 = vld [vmem:[%s318] sm:$0x1]
  %320 = vrot.lane.b32.xlu0 %v319, 81
  %v321 = vpop.permute.xlu0 %320
  %vm322 = vcmask 39936
  %s323 = scalar_lea.vmem %s1, 35
  %324 = vst.msk [vmem:[%s323] sm:$0x1] %vm322, %v321
  %s325 = scalar_lea.vmem %s0, 4
  %v326 = vld [vmem:[%s325] sm:$0x1]
  %327 = vrot.lane.b32.xlu0 %v326, 80
  %v328 = vpop.permute.xlu0 %327
  %vm329 = vcmask 39936
  %s330 = scalar_lea.vmem %s1, 112
  %331 = vst.msk [vmem:[%s330] sm:$0x1] %vm329, %v328
  %s332 = scalar_lea.vmem %s0, 2
  %v333 = vld [vmem:[%s332] sm:$0x1]
  %334 = vrot.lane.b32.xlu0 %v333, 79
  %v335 = vpop.permute.xlu0 %334
  %vm336 = vcmask 39936
  %s337 = scalar_lea.vmem %s1, 61
  %338 = vst.msk [vmem:[%s337] sm:$0x1] %vm336, %v335
  %v339 = vld [vmem:[%s0] sm:$0x1]
  %340 = vrot.lane.b32.xlu0 %v339, 78
  %v341 = vpop.permute.xlu0 %340
  %vm342 = vcmask 39936
  %s343 = scalar_lea.vmem %s1, 10
  %344 = vst.msk [vmem:[%s343] sm:$0x1] %vm342, %v341
  %s345 = scalar_lea.vmem %s0, 3
  %v346 = vld [vmem:[%s345] sm:$0x1]
  %347 = vrot.lane.b32.xlu0 %v346, 77
  %v348 = vpop.permute.xlu0 %347
  %vm349 = vcmask 39936
  %s350 = scalar_lea.vmem %s1, 87
  %351 = vst.msk [vmem:[%s350] sm:$0x1] %vm349, %v348
  %s352 = scalar_lea.vmem %s0, 1
  %v353 = vld [vmem:[%s352] sm:$0x1]
  %354 = vrot.lane.b32.xlu0 %v353, 76
  %v355 = vpop.permute.xlu0 %354
  %vm356 = vcmask 39936
  %s357 = scalar_lea.vmem %s1, 36
  %358 = vst.msk [vmem:[%s357] sm:$0x1] %vm356, %v355
  %s359 = scalar_lea.vmem %s0, 4
  %v360 = vld [vmem:[%s359] sm:$0x1]
  %361 = vrot.lane.b32.xlu0 %v360, 75
  %v362 = vpop.permute.xlu0 %361
  %vm363 = vcmask 39936
  %s364 = scalar_lea.vmem %s1, 113
  %365 = vst.msk [vmem:[%s364] sm:$0x1] %vm363, %v362
  %s366 = scalar_lea.vmem %s0, 2
  %v367 = vld [vmem:[%s366] sm:$0x1]
  %368 = vrot.lane.b32.xlu0 %v367, 74
  %v369 = vpop.permute.xlu0 %368
  %vm370 = vcmask 39936
  %s371 = scalar_lea.vmem %s1, 62
  %372 = vst.msk [vmem:[%s371] sm:$0x1] %vm370, %v369
  %v373 = vld [vmem:[%s0] sm:$0x1]
  %374 = vrot.lane.b32.xlu0 %v373, 73
  %v375 = vpop.permute.xlu0 %374
  %vm376 = vcmask 39936
  %s377 = scalar_lea.vmem %s1, 11
  %378 = vst.msk [vmem:[%s377] sm:$0x1] %vm376, %v375
  %s379 = scalar_lea.vmem %s0, 3
  %v380 = vld [vmem:[%s379] sm:$0x1]
  %381 = vrot.lane.b32.xlu0 %v380, 72
  %v382 = vpop.permute.xlu0 %381
  %vm383 = vcmask 39936
  %s384 = scalar_lea.vmem %s1, 88
  %385 = vst.msk [vmem:[%s384] sm:$0x1] %vm383, %v382
  %s386 = scalar_lea.vmem %s0, 1
  %v387 = vld [vmem:[%s386] sm:$0x1]
  %388 = vrot.lane.b32.xlu0 %v387, 71
  %v389 = vpop.permute.xlu0 %388
  %vm390 = vcmask 39936
  %s391 = scalar_lea.vmem %s1, 37
  %392 = vst.msk [vmem:[%s391] sm:$0x1] %vm390, %v389
  %s393 = scalar_lea.vmem %s0, 4
  %v394 = vld [vmem:[%s393] sm:$0x1]
  %395 = vrot.lane.b32.xlu0 %v394, 70
  %v396 = vpop.permute.xlu0 %395
  %vm397 = vcmask 39936
  %s398 = scalar_lea.vmem %s1, 114
  %399 = vst.msk [vmem:[%s398] sm:$0x1] %vm397, %v396
  %s400 = scalar_lea.vmem %s0, 2
  %v401 = vld [vmem:[%s400] sm:$0x1]
  %402 = vrot.lane.b32.xlu0 %v401, 69
  %v403 = vpop.permute.xlu0 %402
  %vm404 = vcmask 39936
  %s405 = scalar_lea.vmem %s1, 63
  %406 = vst.msk [vmem:[%s405] sm:$0x1] %vm404, %v403
  %v407 = vld [vmem:[%s0] sm:$0x1]
  %408 = vrot.lane.b32.xlu0 %v407, 68
  %v409 = vpop.permute.xlu0 %408
  %vm410 = vcmask 39936
  %s411 = scalar_lea.vmem %s1, 12
  %412 = vst.msk [vmem:[%s411] sm:$0x1] %vm410, %v409
  %s413 = scalar_lea.vmem %s0, 3
  %v414 = vld [vmem:[%s413] sm:$0x1]
  %415 = vrot.lane.b32.xlu0 %v414, 67
  %v416 = vpop.permute.xlu0 %415
  %vm417 = vcmask 39936
  %s418 = scalar_lea.vmem %s1, 89
  %419 = vst.msk [vmem:[%s418] sm:$0x1] %vm417, %v416
  %s420 = scalar_lea.vmem %s0, 1
  %v421 = vld [vmem:[%s420] sm:$0x1]
  %422 = vrot.lane.b32.xlu0 %v421, 66
  %v423 = vpop.permute.xlu0 %422
  %vm424 = vcmask 39936
  %s425 = scalar_lea.vmem %s1, 38
  %426 = vst.msk [vmem:[%s425] sm:$0x1] %vm424, %v423
  %s427 = scalar_lea.vmem %s0, 4
  %v428 = vld [vmem:[%s427] sm:$0x1]
  %429 = vrot.lane.b32.xlu0 %v428, 65
  %v430 = vpop.permute.xlu0 %429
  %vm431 = vcmask 39936
  %s432 = scalar_lea.vmem %s1, 115
  %433 = vst.msk [vmem:[%s432] sm:$0x1] %vm431, %v430
  %s434 = scalar_lea.vmem %s0, 2
  %v435 = vld [vmem:[%s434] sm:$0x1]
  %436 = vrot.lane.b32.xlu0 %v435, 64
  %v437 = vpop.permute.xlu0 %436
  %vm438 = vcmask 39936
  %s439 = scalar_lea.vmem %s1, 64
  %440 = vst.msk [vmem:[%s439] sm:$0x1] %vm438, %v437
  %v441 = vld [vmem:[%s0] sm:$0x1]
  %442 = vrot.lane.b32.xlu0 %v441, 63
  %v443 = vpop.permute.xlu0 %442
  %vm444 = vcmask 39936
  %s445 = scalar_lea.vmem %s1, 13
  %446 = vst.msk [vmem:[%s445] sm:$0x1] %vm444, %v443
  %s447 = scalar_lea.vmem %s0, 3
  %v448 = vld [vmem:[%s447] sm:$0x1]
  %449 = vrot.lane.b32.xlu0 %v448, 62
  %v450 = vpop.permute.xlu0 %449
  %vm451 = vcmask 39936
  %s452 = scalar_lea.vmem %s1, 90
  %453 = vst.msk [vmem:[%s452] sm:$0x1] %vm451, %v450
  %s454 = scalar_lea.vmem %s0, 1
  %v455 = vld [vmem:[%s454] sm:$0x1]
  %456 = vrot.lane.b32.xlu0 %v455, 61
  %v457 = vpop.permute.xlu0 %456
  %vm458 = vcmask 39936
  %s459 = scalar_lea.vmem %s1, 39
  %460 = vst.msk [vmem:[%s459] sm:$0x1] %vm458, %v457
  %s461 = scalar_lea.vmem %s0, 4
  %v462 = vld [vmem:[%s461] sm:$0x1]
  %463 = vrot.lane.b32.xlu0 %v462, 60
  %v464 = vpop.permute.xlu0 %463
  %vm465 = vcmask 39936
  %s466 = scalar_lea.vmem %s1, 116
  %467 = vst.msk [vmem:[%s466] sm:$0x1] %vm465, %v464
  %s468 = scalar_lea.vmem %s0, 2
  %v469 = vld [vmem:[%s468] sm:$0x1]
  %470 = vrot.lane.b32.xlu0 %v469, 59
  %v471 = vpop.permute.xlu0 %470
  %vm472 = vcmask 39936
  %s473 = scalar_lea.vmem %s1, 65
  %474 = vst.msk [vmem:[%s473] sm:$0x1] %vm472, %v471
  %v475 = vld [vmem:[%s0] sm:$0x1]
  %476 = vrot.lane.b32.xlu0 %v475, 58
  %v477 = vpop.permute.xlu0 %476
  %vm478 = vcmask 39936
  %s479 = scalar_lea.vmem %s1, 14
  %480 = vst.msk [vmem:[%s479] sm:$0x1] %vm478, %v477
  %s481 = scalar_lea.vmem %s0, 3
  %v482 = vld [vmem:[%s481] sm:$0x1]
  %483 = vrot.lane.b32.xlu0 %v482, 57
  %v484 = vpop.permute.xlu0 %483
  %vm485 = vcmask 39936
  %s486 = scalar_lea.vmem %s1, 91
  %487 = vst.msk [vmem:[%s486] sm:$0x1] %vm485, %v484
  %s488 = scalar_lea.vmem %s0, 1
  %v489 = vld [vmem:[%s488] sm:$0x1]
  %490 = vrot.lane.b32.xlu0 %v489, 56
  %v491 = vpop.permute.xlu0 %490
  %vm492 = vcmask 39936
  %s493 = scalar_lea.vmem %s1, 40
  %494 = vst.msk [vmem:[%s493] sm:$0x1] %vm492, %v491
  %s495 = scalar_lea.vmem %s0, 4
  %v496 = vld [vmem:[%s495] sm:$0x1]
  %497 = vrot.lane.b32.xlu0 %v496, 55
  %v498 = vpop.permute.xlu0 %497
  %vm499 = vcmask 39936
  %s500 = scalar_lea.vmem %s1, 117
  %501 = vst.msk [vmem:[%s500] sm:$0x1] %vm499, %v498
  %s502 = scalar_lea.vmem %s0, 2
  %v503 = vld [vmem:[%s502] sm:$0x1]
  %504 = vrot.lane.b32.xlu0 %v503, 54
  %v505 = vpop.permute.xlu0 %504
  %vm506 = vcmask 39936
  %s507 = scalar_lea.vmem %s1, 66
  %508 = vst.msk [vmem:[%s507] sm:$0x1] %vm506, %v505
  %v509 = vld [vmem:[%s0] sm:$0x1]
  %510 = vrot.lane.b32.xlu0 %v509, 53
  %v511 = vpop.permute.xlu0 %510
  %vm512 = vcmask 39936
  %s513 = scalar_lea.vmem %s1, 15
  %514 = vst.msk [vmem:[%s513] sm:$0x1] %vm512, %v511
  %s515 = scalar_lea.vmem %s0, 3
  %v516 = vld [vmem:[%s515] sm:$0x1]
  %517 = vrot.lane.b32.xlu0 %v516, 52
  %v518 = vpop.permute.xlu0 %517
  %vm519 = vcmask 39936
  %s520 = scalar_lea.vmem %s1, 92
  %521 = vst.msk [vmem:[%s520] sm:$0x1] %vm519, %v518
  %s522 = scalar_lea.vmem %s0, 1
  %v523 = vld [vmem:[%s522] sm:$0x1]
  %524 = vrot.lane.b32.xlu0 %v523, 51
  %v525 = vpop.permute.xlu0 %524
  %vm526 = vcmask 39936
  %s527 = scalar_lea.vmem %s1, 41
  %528 = vst.msk [vmem:[%s527] sm:$0x1] %vm526, %v525
  %s529 = scalar_lea.vmem %s0, 4
  %v530 = vld [vmem:[%s529] sm:$0x1]
  %531 = vrot.lane.b32.xlu0 %v530, 50
  %v532 = vpop.permute.xlu0 %531
  %vm533 = vcmask 39936
  %s534 = scalar_lea.vmem %s1, 118
  %535 = vst.msk [vmem:[%s534] sm:$0x1] %vm533, %v532
  %s536 = scalar_lea.vmem %s0, 2
  %v537 = vld [vmem:[%s536] sm:$0x1]
  %538 = vrot.lane.b32.xlu0 %v537, 49
  %v539 = vpop.permute.xlu0 %538
  %vm540 = vcmask 39936
  %s541 = scalar_lea.vmem %s1, 67
  %542 = vst.msk [vmem:[%s541] sm:$0x1] %vm540, %v539
  %v543 = vld [vmem:[%s0] sm:$0x1]
  %544 = vrot.lane.b32.xlu0 %v543, 48
  %v545 = vpop.permute.xlu0 %544
  %vm546 = vcmask 39936
  %s547 = scalar_lea.vmem %s1, 16
  %548 = vst.msk [vmem:[%s547] sm:$0x1] %vm546, %v545
  %s549 = scalar_lea.vmem %s0, 3
  %v550 = vld [vmem:[%s549] sm:$0x1]
  %551 = vrot.lane.b32.xlu0 %v550, 47
  %v552 = vpop.permute.xlu0 %551
  %vm553 = vcmask 39936
  %s554 = scalar_lea.vmem %s1, 93
  %555 = vst.msk [vmem:[%s554] sm:$0x1] %vm553, %v552
  %s556 = scalar_lea.vmem %s0, 1
  %v557 = vld [vmem:[%s556] sm:$0x1]
  %558 = vrot.lane.b32.xlu0 %v557, 46
  %v559 = vpop.permute.xlu0 %558
  %vm560 = vcmask 39936
  %s561 = scalar_lea.vmem %s1, 42
  %562 = vst.msk [vmem:[%s561] sm:$0x1] %vm560, %v559
  %s563 = scalar_lea.vmem %s0, 4
  %v564 = vld [vmem:[%s563] sm:$0x1]
  %565 = vrot.lane.b32.xlu0 %v564, 45
  %v566 = vpop.permute.xlu0 %565
  %vm567 = vcmask 39936
  %s568 = scalar_lea.vmem %s1, 119
  %569 = vst.msk [vmem:[%s568] sm:$0x1] %vm567, %v566
  %s570 = scalar_lea.vmem %s0, 2
  %v571 = vld [vmem:[%s570] sm:$0x1]
  %572 = vrot.lane.b32.xlu0 %v571, 44
  %v573 = vpop.permute.xlu0 %572
  %vm574 = vcmask 39936
  %s575 = scalar_lea.vmem %s1, 68
  %576 = vst.msk [vmem:[%s575] sm:$0x1] %vm574, %v573
  %v577 = vld [vmem:[%s0] sm:$0x1]
  %578 = vrot.lane.b32.xlu0 %v577, 43
  %v579 = vpop.permute.xlu0 %578
  %vm580 = vcmask 39936
  %s581 = scalar_lea.vmem %s1, 17
  %582 = vst.msk [vmem:[%s581] sm:$0x1] %vm580, %v579
  %s583 = scalar_lea.vmem %s0, 3
  %v584 = vld [vmem:[%s583] sm:$0x1]
  %585 = vrot.lane.b32.xlu0 %v584, 42
  %v586 = vpop.permute.xlu0 %585
  %vm587 = vcmask 39936
  %s588 = scalar_lea.vmem %s1, 94
  %589 = vst.msk [vmem:[%s588] sm:$0x1] %vm587, %v586
  %s590 = scalar_lea.vmem %s0, 1
  %v591 = vld [vmem:[%s590] sm:$0x1]
  %592 = vrot.lane.b32.xlu0 %v591, 41
  %v593 = vpop.permute.xlu0 %592
  %vm594 = vcmask 39936
  %s595 = scalar_lea.vmem %s1, 43
  %596 = vst.msk [vmem:[%s595] sm:$0x1] %vm594, %v593
  %s597 = scalar_lea.vmem %s0, 4
  %v598 = vld [vmem:[%s597] sm:$0x1]
  %599 = vrot.lane.b32.xlu0 %v598, 40
  %v600 = vpop.permute.xlu0 %599
  %vm601 = vcmask 39936
  %s602 = scalar_lea.vmem %s1, 120
  %603 = vst.msk [vmem:[%s602] sm:$0x1] %vm601, %v600
  %s604 = scalar_lea.vmem %s0, 2
  %v605 = vld [vmem:[%s604] sm:$0x1]
  %606 = vrot.lane.b32.xlu0 %v605, 39
  %v607 = vpop.permute.xlu0 %606
  %vm608 = vcmask 39936
  %s609 = scalar_lea.vmem %s1, 69
  %610 = vst.msk [vmem:[%s609] sm:$0x1] %vm608, %v607
  %v611 = vld [vmem:[%s0] sm:$0x1]
  %612 = vrot.lane.b32.xlu0 %v611, 38
  %v613 = vpop.permute.xlu0 %612
  %vm614 = vcmask 39936
  %s615 = scalar_lea.vmem %s1, 18
  %616 = vst.msk [vmem:[%s615] sm:$0x1] %vm614, %v613
  %s617 = scalar_lea.vmem %s0, 3
  %v618 = vld [vmem:[%s617] sm:$0x1]
  %619 = vrot.lane.b32.xlu0 %v618, 37
  %v620 = vpop.permute.xlu0 %619
  %vm621 = vcmask 39936
  %s622 = scalar_lea.vmem %s1, 95
  %623 = vst.msk [vmem:[%s622] sm:$0x1] %vm621, %v620
  %s624 = scalar_lea.vmem %s0, 1
  %v625 = vld [vmem:[%s624] sm:$0x1]
  %626 = vrot.lane.b32.xlu0 %v625, 36
  %v627 = vpop.permute.xlu0 %626
  %vm628 = vcmask 39936
  %s629 = scalar_lea.vmem %s1, 44
  %630 = vst.msk [vmem:[%s629] sm:$0x1] %vm628, %v627
  %s631 = scalar_lea.vmem %s0, 4
  %v632 = vld [vmem:[%s631] sm:$0x1]
  %633 = vrot.lane.b32.xlu0 %v632, 35
  %v634 = vpop.permute.xlu0 %633
  %vm635 = vcmask 39936
  %s636 = scalar_lea.vmem %s1, 121
  %637 = vst.msk [vmem:[%s636] sm:$0x1] %vm635, %v634
  %s638 = scalar_lea.vmem %s0, 2
  %v639 = vld [vmem:[%s638] sm:$0x1]
  %640 = vrot.lane.b32.xlu0 %v639, 34
  %v641 = vpop.permute.xlu0 %640
  %vm642 = vcmask 39936
  %s643 = scalar_lea.vmem %s1, 70
  %644 = vst.msk [vmem:[%s643] sm:$0x1] %vm642, %v641
  %v645 = vld [vmem:[%s0] sm:$0x1]
  %646 = vrot.lane.b32.xlu0 %v645, 33
  %v647 = vpop.permute.xlu0 %646
  %vm648 = vcmask 39936
  %s649 = scalar_lea.vmem %s1, 19
  %650 = vst.msk [vmem:[%s649] sm:$0x1] %vm648, %v647
  %s651 = scalar_lea.vmem %s0, 3
  %v652 = vld [vmem:[%s651] sm:$0x1]
  %653 = vrot.lane.b32.xlu0 %v652, 32
  %v654 = vpop.permute.xlu0 %653
  %vm655 = vcmask 39936
  %s656 = scalar_lea.vmem %s1, 96
  %657 = vst.msk [vmem:[%s656] sm:$0x1] %vm655, %v654
  %s658 = scalar_lea.vmem %s0, 1
  %v659 = vld [vmem:[%s658] sm:$0x1]
  %660 = vrot.lane.b32.xlu0 %v659, 31
  %v661 = vpop.permute.xlu0 %660
  %vm662 = vcmask 39936
  %s663 = scalar_lea.vmem %s1, 45
  %664 = vst.msk [vmem:[%s663] sm:$0x1] %vm662, %v661
  %s665 = scalar_lea.vmem %s0, 4
  %v666 = vld [vmem:[%s665] sm:$0x1]
  %667 = vrot.lane.b32.xlu0 %v666, 30
  %v668 = vpop.permute.xlu0 %667
  %vm669 = vcmask 39936
  %s670 = scalar_lea.vmem %s1, 122
  %671 = vst.msk [vmem:[%s670] sm:$0x1] %vm669, %v668
  %s672 = scalar_lea.vmem %s0, 2
  %v673 = vld [vmem:[%s672] sm:$0x1]
  %674 = vrot.lane.b32.xlu0 %v673, 29
  %v675 = vpop.permute.xlu0 %674
  %vm676 = vcmask 39936
  %s677 = scalar_lea.vmem %s1, 71
  %678 = vst.msk [vmem:[%s677] sm:$0x1] %vm676, %v675
  %v679 = vld [vmem:[%s0] sm:$0x1]
  %680 = vrot.lane.b32.xlu0 %v679, 28
  %v681 = vpop.permute.xlu0 %680
  %vm682 = vcmask 39936
  %s683 = scalar_lea.vmem %s1, 20
  %684 = vst.msk [vmem:[%s683] sm:$0x1] %vm682, %v681
  %s685 = scalar_lea.vmem %s0, 3
  %v686 = vld [vmem:[%s685] sm:$0x1]
  %687 = vrot.lane.b32.xlu0 %v686, 27
  %v688 = vpop.permute.xlu0 %687
  %vm689 = vcmask 39936
  %s690 = scalar_lea.vmem %s1, 97
  %691 = vst.msk [vmem:[%s690] sm:$0x1] %vm689, %v688
  %s692 = scalar_lea.vmem %s0, 1
  %v693 = vld [vmem:[%s692] sm:$0x1]
  %694 = vrot.lane.b32.xlu0 %v693, 26
  %v695 = vpop.permute.xlu0 %694
  %vm696 = vcmask 39936
  %s697 = scalar_lea.vmem %s1, 46
  %698 = vst.msk [vmem:[%s697] sm:$0x1] %vm696, %v695
  %s699 = scalar_lea.vmem %s0, 4
  %v700 = vld [vmem:[%s699] sm:$0x1]
  %701 = vrot.lane.b32.xlu0 %v700, 25
  %v702 = vpop.permute.xlu0 %701
  %vm703 = vcmask 39936
  %s704 = scalar_lea.vmem %s1, 123
  %705 = vst.msk [vmem:[%s704] sm:$0x1] %vm703, %v702
  %s706 = scalar_lea.vmem %s0, 2
  %v707 = vld [vmem:[%s706] sm:$0x1]
  %708 = vrot.lane.b32.xlu0 %v707, 24
  %v709 = vpop.permute.xlu0 %708
  %vm710 = vcmask 39936
  %s711 = scalar_lea.vmem %s1, 72
  %712 = vst.msk [vmem:[%s711] sm:$0x1] %vm710, %v709
  %v713 = vld [vmem:[%s0] sm:$0x1]
  %714 = vrot.lane.b32.xlu0 %v713, 23
  %v715 = vpop.permute.xlu0 %714
  %vm716 = vcmask 39936
  %s717 = scalar_lea.vmem %s1, 21
  %718 = vst.msk [vmem:[%s717] sm:$0x1] %vm716, %v715
  %s719 = scalar_lea.vmem %s0, 3
  %v720 = vld [vmem:[%s719] sm:$0x1]
  %721 = vrot.lane.b32.xlu0 %v720, 22
  %v722 = vpop.permute.xlu0 %721
  %vm723 = vcmask 39936
  %s724 = scalar_lea.vmem %s1, 98
  %725 = vst.msk [vmem:[%s724] sm:$0x1] %vm723, %v722
  %s726 = scalar_lea.vmem %s0, 1
  %v727 = vld [vmem:[%s726] sm:$0x1]
  %728 = vrot.lane.b32.xlu0 %v727, 21
  %v729 = vpop.permute.xlu0 %728
  %vm730 = vcmask 39936
  %s731 = scalar_lea.vmem %s1, 47
  %732 = vst.msk [vmem:[%s731] sm:$0x1] %vm730, %v729
  %s733 = scalar_lea.vmem %s0, 4
  %v734 = vld [vmem:[%s733] sm:$0x1]
  %735 = vrot.lane.b32.xlu0 %v734, 20
  %v736 = vpop.permute.xlu0 %735
  %vm737 = vcmask 39936
  %s738 = scalar_lea.vmem %s1, 124
  %739 = vst.msk [vmem:[%s738] sm:$0x1] %vm737, %v736
  %s740 = scalar_lea.vmem %s0, 2
  %v741 = vld [vmem:[%s740] sm:$0x1]
  %742 = vrot.lane.b32.xlu0 %v741, 19
  %v743 = vpop.permute.xlu0 %742
  %vm744 = vcmask 39936
  %s745 = scalar_lea.vmem %s1, 73
  %746 = vst.msk [vmem:[%s745] sm:$0x1] %vm744, %v743
  %v747 = vld [vmem:[%s0] sm:$0x1]
  %748 = vrot.lane.b32.xlu0 %v747, 18
  %v749 = vpop.permute.xlu0 %748
  %vm750 = vcmask 39936
  %s751 = scalar_lea.vmem %s1, 22
  %752 = vst.msk [vmem:[%s751] sm:$0x1] %vm750, %v749
  %s753 = scalar_lea.vmem %s0, 3
  %v754 = vld [vmem:[%s753] sm:$0x1]
  %755 = vrot.lane.b32.xlu0 %v754, 17
  %v756 = vpop.permute.xlu0 %755
  %vm757 = vcmask 39936
  %s758 = scalar_lea.vmem %s1, 99
  %759 = vst.msk [vmem:[%s758] sm:$0x1] %vm757, %v756
  %s760 = scalar_lea.vmem %s0, 1
  %v761 = vld [vmem:[%s760] sm:$0x1]
  %762 = vrot.lane.b32.xlu0 %v761, 16
  %v763 = vpop.permute.xlu0 %762
  %vm764 = vcmask 39936
  %s765 = scalar_lea.vmem %s1, 48
  %766 = vst.msk [vmem:[%s765] sm:$0x1] %vm764, %v763
  %s767 = scalar_lea.vmem %s0, 4
  %v768 = vld [vmem:[%s767] sm:$0x1]
  %769 = vrot.lane.b32.xlu0 %v768, 15
  %v770 = vpop.permute.xlu0 %769
  %vm771 = vcmask 39936
  %s772 = scalar_lea.vmem %s1, 125
  %773 = vst.msk [vmem:[%s772] sm:$0x1] %vm771, %v770
  %s774 = scalar_lea.vmem %s0, 2
  %v775 = vld [vmem:[%s774] sm:$0x1]
  %776 = vrot.lane.b32.xlu0 %v775, 14
  %v777 = vpop.permute.xlu0 %776
  %vm778 = vcmask 39936
  %s779 = scalar_lea.vmem %s1, 74
  %780 = vst.msk [vmem:[%s779] sm:$0x1] %vm778, %v777
  %v781 = vld [vmem:[%s0] sm:$0x1]
  %782 = vrot.lane.b32.xlu0 %v781, 13
  %v783 = vpop.permute.xlu0 %782
  %vm784 = vcmask 39936
  %s785 = scalar_lea.vmem %s1, 23
  %786 = vst.msk [vmem:[%s785] sm:$0x1] %vm784, %v783
  %s787 = scalar_lea.vmem %s0, 3
  %v788 = vld [vmem:[%s787] sm:$0x1]
  %789 = vrot.lane.b32.xlu0 %v788, 12
  %v790 = vpop.permute.xlu0 %789
  %vm791 = vcmask 39936
  %s792 = scalar_lea.vmem %s1, 100
  %793 = vst.msk [vmem:[%s792] sm:$0x1] %vm791, %v790
  %s794 = scalar_lea.vmem %s0, 1
  %v795 = vld [vmem:[%s794] sm:$0x1]
  %796 = vrot.lane.b32.xlu0 %v795, 11
  %v797 = vpop.permute.xlu0 %796
  %vm798 = vcmask 39936
  %s799 = scalar_lea.vmem %s1, 49
  %800 = vst.msk [vmem:[%s799] sm:$0x1] %vm798, %v797
  %s801 = scalar_lea.vmem %s0, 4
  %v802 = vld [vmem:[%s801] sm:$0x1]
  %803 = vrot.lane.b32.xlu0 %v802, 10
  %v804 = vpop.permute.xlu0 %803
  %vm805 = vcmask 39936
  %s806 = scalar_lea.vmem %s1, 126
  %807 = vst.msk [vmem:[%s806] sm:$0x1] %vm805, %v804
  %s808 = scalar_lea.vmem %s0, 2
  %v809 = vld [vmem:[%s808] sm:$0x1]
  %810 = vrot.lane.b32.xlu0 %v809, 9
  %v811 = vpop.permute.xlu0 %810
  %vm812 = vcmask 39936
  %s813 = scalar_lea.vmem %s1, 75
  %814 = vst.msk [vmem:[%s813] sm:$0x1] %vm812, %v811
  %v815 = vld [vmem:[%s0] sm:$0x1]
  %816 = vrot.lane.b32.xlu0 %v815, 8
  %v817 = vpop.permute.xlu0 %816
  %vm818 = vcmask 39936
  %s819 = scalar_lea.vmem %s1, 24
  %820 = vst.msk [vmem:[%s819] sm:$0x1] %vm818, %v817
  %s821 = scalar_lea.vmem %s0, 3
  %v822 = vld [vmem:[%s821] sm:$0x1]
  %823 = vrot.lane.b32.xlu0 %v822, 7
  %v824 = vpop.permute.xlu0 %823
  %vm825 = vcmask 39936
  %s826 = scalar_lea.vmem %s1, 101
  %827 = vst.msk [vmem:[%s826] sm:$0x1] %vm825, %v824
  %s828 = scalar_lea.vmem %s0, 1
  %v829 = vld [vmem:[%s828] sm:$0x1]
  %830 = vrot.lane.b32.xlu0 %v829, 6
  %v831 = vpop.permute.xlu0 %830
  %vm832 = vcmask 39936
  %s833 = scalar_lea.vmem %s1, 50
  %834 = vst.msk [vmem:[%s833] sm:$0x1] %vm832, %v831
  %s835 = scalar_lea.vmem %s0, 4
  %v836 = vld [vmem:[%s835] sm:$0x1]
  %837 = vrot.lane.b32.xlu0 %v836, 5
  %v838 = vpop.permute.xlu0 %837
  %vm839 = vcmask 39936
  %s840 = scalar_lea.vmem %s1, 127
  %841 = vst.msk [vmem:[%s840] sm:$0x1] %vm839, %v838
  %s842 = scalar_lea.vmem %s0, 2
  %v843 = vld [vmem:[%s842] sm:$0x1]
  %s844 = scalar_lea.vmem %s0, 3
  %v845 = vld [vmem:[%s844] sm:$0x1]
  %vm846 = vcmask 1014784
  %v847 = vsel %vm846, %v845, %v843
  %848 = vrot.lane.b32.xlu0 %v847, 4
  %v849 = vpop.permute.xlu0 %848
  %vm850 = vcmask 31744
  %s851 = scalar_lea.vmem %s1, 76
  %852 = vst.msk [vmem:[%s851] sm:$0x1] %vm850, %v849
  %vm853 = vcmask 39968
  %s854 = scalar_lea.vmem %s1, 76
  %855 = vst.msk [vmem:[%s854] sm:$0x1] %vm853, %v849
  %v856 = vld [vmem:[%s0] sm:$0x1]
  %s857 = scalar_lea.vmem %s0, 1
  %v858 = vld [vmem:[%s857] sm:$0x1]
  %vm859 = vcmask 1022976
  %v860 = vsel %vm859, %v858, %v856
  %861 = vrot.lane.b32.xlu0 %v860, 3
  %v862 = vpop.permute.xlu0 %861
  %vm863 = vcmask 23552
  %s864 = scalar_lea.vmem %s1, 25
  %865 = vst.msk [vmem:[%s864] sm:$0x1] %vm863, %v862
  %vm866 = vcmask 39960
  %s867 = scalar_lea.vmem %s1, 25
  %868 = vst.msk [vmem:[%s867] sm:$0x1] %vm866, %v862
  %s869 = scalar_lea.vmem %s0, 3
  %v870 = vld [vmem:[%s869] sm:$0x1]
  %s871 = scalar_lea.vmem %s0, 4
  %v872 = vld [vmem:[%s871] sm:$0x1]
  %vm873 = vcmask 1031168
  %v874 = vsel %vm873, %v872, %v870
  %875 = vrot.lane.b32.xlu0 %v874, 2
  %v876 = vpop.permute.xlu0 %875
  %vm877 = vcmask 15360
  %s878 = scalar_lea.vmem %s1, 102
  %879 = vst.msk [vmem:[%s878] sm:$0x1] %vm877, %v876
  %vm880 = vcmask 39952
  %s881 = scalar_lea.vmem %s1, 102
  %882 = vst.msk [vmem:[%s881] sm:$0x1] %vm880, %v876
  %s883 = scalar_lea.vmem %s0, 1
  %v884 = vld [vmem:[%s883] sm:$0x1]
  %s885 = scalar_lea.vmem %s0, 2
  %v886 = vld [vmem:[%s885] sm:$0x1]
  %vm887 = vcmask 1039360
  %v888 = vsel %vm887, %v886, %v884
  %889 = vrot.lane.b32.xlu0 %v888, 1
  %v890 = vpop.permute.xlu0 %889
  %vm891 = vcmask 7168
  %s892 = scalar_lea.vmem %s1, 51
  %893 = vst.msk [vmem:[%s892] sm:$0x1] %vm891, %v890
  %vm894 = vcmask 39944
  %s895 = scalar_lea.vmem %s1, 51
  %896 = vst.msk [vmem:[%s895] sm:$0x1] %vm894, %v890

// kernel: pallas_loss.1
$region0: #{pallas_loss.1}
  #allocation0 [shape = 'u32[]', space=smem, size = 0x4, offset = 0x4, fixed_abs, tag = 'smem constant byte address 0x4 - core index']
  #allocation1 [shape = 'u32[72,128]{1,0:T(1,128)}', space=vmem, size = 0x9000, scoped, tag = 'internal scratch']
  %s0 = inlined_call_operand.vmem [shape: f32[2,640], index: 0, kind: input, shape index: {}]
  %s1 = inlined_call_operand.vmem [shape: f32[2,640], index: 1, kind: input, shape index: {}]
  %s2 = inlined_call_operand.vmem [shape: f32[32,640], index: 2, kind: output, shape index: {}]
  %s3 = sld [smem:[#allocation0]]
  $region49: #{pallas_loss.1} parent=0
    _
  %s5 = ssub.s32 1, %s3
  %s6 = scalar_select 0, %s5, %s3
  loop: start=0, step=1, limit=4
  $region2: #{pallas_loss.1} parent=0 // loop_pre_header
    _
  $region3: #{pallas_loss.1} parent=0 // loop_header
    %s8 = sphi 0, %s12
    %p9 = scmp.ge.s32.totalorder %s8, 4
    %s15 = sphi 0, %s27
    %s16 = sphi 0, %s23
    %s17 = sphi 0, %s15
    %s18 = sphi 0, %s16
    %s19 = sphi 0, %s17
    %s20 = sphi 0, %s18
    %s36 = sphi 0, %s38
    %s39 = sphi 0, %s36
    %s40 = sphi 0, %s39
    %s56 = sphi 0, %s40
    %s68 = sphi 0, %s70
    %s71 = sphi 0, %s68
    %s72 = sphi 0, %s71
    %s88 = sphi 0, %s72
    %s94 = sphi 0, %s96
    %s97 = sphi 0, %s94
    %s98 = sphi 0, %s97
    %s114 = sphi 0, %s98
  $region4: #{pallas_loss.1} parent=0 // loop_header_branch
    %11 = sbr.rel (%p9) target = $region8
  $region5: #{pallas_loss.1} parent=0 // loop_body
    %s13 = ssub.s32 %s8, 1
    %s14 = ssub.s32 %s8, 2
    %s21 = sadd.s32 1, %s16
    %p22 = scmp.ge.s32.totalorder %s21, 1
    %s23 = scalar_select %p22, 0, %s21
    %s24 = sadd.s32 1, %s15
    %s25 = scalar_select %p22, %s24, %s15
    %p26 = scmp.ge.s32.totalorder %s25, 2
    %s27 = scalar_select %p26, 0, %s25
    %s28 = sadd.s32 %s15, %s16
    %p29 = scmp.lt.s32.totalorder %s28, 0
    %s30 = scalar_select %p29, %s28, 0
    %s31 = sadd.s32 %s27, %s23
    %p32 = scmp.lt.s32.totalorder %s31, 0
    %s33 = scalar_select %p32, %s31, 0
    %s34 = ssub.s32 %s30, %s33
    %p35 = scmp.eq.s32.totalorder %s34, 0
    %s37 = sadd.s32 %s36, 1
    %s38 = scalar_select %p35, %s36, %s37
    %p41 = pneg %p35
    %p42 = scmp.eq.s32.totalorder %s8, 1
    %p43 = por %p41, %p42
    %p44 = scmp.ne.s32.totalorder %s36, %s39
    %p45 = scmp.eq.s32.totalorder %s8, 0
    %p46 = por %p44, %p45
    %p47 = scmp.ne.s32.totalorder %s36, %s39
    %p48 = scmp.eq.s32.totalorder %s13, 1
    %p49 = por %p47, %p48
    %p50 = scmp.ne.s32.totalorder %s39, %s40
    %p51 = scmp.eq.s32.totalorder %s13, 0
    %p52 = por %p50, %p51
    %p53 = scmp.ne.s32.totalorder %s39, %s40
    %p54 = scmp.eq.s32.totalorder %s14, 1
    %p55 = por %p53, %p54
    %p57 = scmp.ne.s32.totalorder %s40, %s56
    %p58 = scmp.eq.s32.totalorder %s14, 0
    %p59 = por %p57, %p58
    %s60 = sadd.s32 %s15, %s16
    %p61 = scmp.lt.s32.totalorder %s60, 0
    %s62 = scalar_select %p61, %s60, 0
    %s63 = sadd.s32 %s27, %s23
    %p64 = scmp.lt.s32.totalorder %s63, 0
    %s65 = scalar_select %p64, %s63, 0
    %s66 = ssub.s32 %s62, %s65
    %p67 = scmp.eq.s32.totalorder %s66, 0
    %s69 = sadd.s32 %s68, 1
    %s70 = scalar_select %p67, %s68, %s69
    %p73 = pneg %p67
    %p74 = scmp.eq.s32.totalorder %s8, 1
    %p75 = por %p73, %p74
    %p76 = scmp.ne.s32.totalorder %s68, %s71
    %p77 = scmp.eq.s32.totalorder %s8, 0
    %p78 = por %p76, %p77
    %p79 = scmp.ne.s32.totalorder %s68, %s71
    %p80 = scmp.eq.s32.totalorder %s13, 1
    %p81 = por %p79, %p80
    %p82 = scmp.ne.s32.totalorder %s71, %s72
    %p83 = scmp.eq.s32.totalorder %s13, 0
    %p84 = por %p82, %p83
    %p85 = scmp.ne.s32.totalorder %s71, %s72
    %p86 = scmp.eq.s32.totalorder %s14, 1
    %p87 = por %p85, %p86
    %p89 = scmp.ne.s32.totalorder %s72, %s88
    %p90 = scmp.eq.s32.totalorder %s14, 0
    %p91 = por %p89, %p90
    %s92 = ssub.s32 %s15, %s27
    %p93 = scmp.eq.s32.totalorder %s92, 0
    %s95 = sadd.s32 %s94, 1
    %s96 = scalar_select %p93, %s94, %s95
    %p99 = pneg %p93
    %p100 = scmp.eq.s32.totalorder %s8, 1
    %p101 = por %p99, %p100
    %p102 = scmp.ne.s32.totalorder %s94, %s97
    %p103 = scmp.eq.s32.totalorder %s8, 0
    %p104 = por %p102, %p103
    %p105 = scmp.ne.s32.totalorder %s94, %s97
    %p106 = scmp.eq.s32.totalorder %s13, 1
    %p107 = por %p105, %p106
    %p108 = scmp.ne.s32.totalorder %s97, %s98
    %p109 = scmp.eq.s32.totalorder %s13, 0
    %p110 = por %p108, %p109
    %p111 = scmp.ne.s32.totalorder %s97, %s98
    %p112 = scmp.eq.s32.totalorder %s14, 1
    %p113 = por %p111, %p112
    %p115 = scmp.ne.s32.totalorder %s98, %s114
    %p116 = scmp.eq.s32.totalorder %s14, 0
    %p117 = por %p115, %p116
    %p118 = scmp.le.s32.totalorder 1, %s8
    %p119 = scmp.lt.s32.totalorder %s8, 3
    %p120 = pnand %p118, %p119
    %p121 = pneg %p120
    // Predicated region
    $region9: #{pallas_loss.1} parent=5 // pred_check
      _
    $region10: #{pallas_loss.1} parent=5 // pred_check_branch
      %123 = sbr.rel (%p120) target = $region12
    $region11: #{pallas_loss.1} parent=5 // pred_region
      %s124 = ssub.s32 %s8, 1
    $region12: #{pallas_loss.1} parent=5 // pred_fallthru
      _
    %p125 = scmp.lt.s32.totalorder %s8, 2
    // Predicated region
    $region13: #{pallas_loss.1} parent=5 // pred_check
      %p126 = pneg %p125
    $region14: #{pallas_loss.1} parent=5 // pred_check_branch
      %128 = sbr.rel (%p126) target = $region16
    $region15: #{pallas_loss.1} parent=5 // pred_region
      // Predicated region
      $region17: #{pallas_loss.1} parent=15 // pred_check
        %p129 = pneg %p46
      $region18: #{pallas_loss.1} parent=15 // pred_check_branch
        %131 = sbr.rel (%p129) target = $region20
      $region19: #{pallas_loss.1} parent=15 // pred_region
        %s132 = sadd.s32 %s15, %s16
        %p133 = scmp.lt.s32.totalorder %s132, 0
        %s134 = scalar_select %p133, %s132, 0
        %p135 = scmp.lt.s32.totalorder %s134, 0
        %s136 = scalar_select %p135, %s134, 0
        %s137 = smul.addr %s136, 5
        %s138 = smul.addr %s137, 2
        %s139 = scalar_lea.vmem %s0, %s138
        %s140 = sadd.s32 %s15, %s16
        %p141 = scmp.lt.s32.totalorder %s140, 0
        %s142 = scalar_select %p141, %s140, 0
      $region20: #{pallas_loss.1} parent=15 // pred_fallthru
        _
      // Predicated region
      $region21: #{pallas_loss.1} parent=15 // pred_check
        %p143 = pneg %p78
      $region22: #{pallas_loss.1} parent=15 // pred_check_branch
        %145 = sbr.rel (%p143) target = $region24
      $region23: #{pallas_loss.1} parent=15 // pred_region
        %s146 = sadd.s32 %s15, %s16
        %p147 = scmp.lt.s32.totalorder %s146, 0
        %s148 = scalar_select %p147, %s146, 0
        %p149 = scmp.lt.s32.totalorder %s148, 0
        %s150 = scalar_select %p149, %s148, 0
        %s151 = smul.addr %s150, 5
        %s152 = smul.addr %s151, 2
        %s153 = scalar_lea.vmem %s1, %s152
        %s154 = sadd.s32 %s15, %s16
        %p155 = scmp.lt.s32.totalorder %s154, 0
        %s156 = scalar_select %p155, %s154, 0
      $region24: #{pallas_loss.1} parent=15 // pred_fallthru
        _
    $region16: #{pallas_loss.1} parent=5 // pred_fallthru
      _
    %p157 = scmp.le.s32.totalorder 1, %s8
    %p158 = scmp.lt.s32.totalorder %s8, 3
    %p159 = pnand %p157, %p158
    %p160 = pneg %p159
    // Predicated region
    $region25: #{pallas_loss.1} parent=5 // pred_check
      _
    $region26: #{pallas_loss.1} parent=5 // pred_check_branch
      %162 = sbr.rel (%p159) target = $region28
    $region27: #{pallas_loss.1} parent=5 // pred_region
      %s163 = ssub.s32 %s8, 1
      %s164 = sadd.s32 %s17, %s18
      %p165 = scmp.lt.s32.totalorder %s164, 0
      %s166 = scalar_select %p165, %s164, 0
      %p167 = scmp.lt.s32.totalorder %s166, 0
      %s168 = scalar_select %p167, %s166, 0
      %s169 = smul.addr %s168, 5
      %s170 = smul.addr %s169, 2
      %s171 = scalar_lea.vmem %s0, %s170
      %p172 = pneg %p52
      %p173 = pneg %p49
      %s174 = sadd.s32 %s17, %s18
      %p175 = scmp.lt.s32.totalorder %s174, 0
      %s176 = scalar_select %p175, %s174, 0
      %p177 = scmp.lt.s32.totalorder %s176, 0
      %s178 = scalar_select %p177, %s176, 0
      %s179 = smul.addr %s178, 5
      %s180 = smul.addr %s179, 2
      %s181 = scalar_lea.vmem %s1, %s180
      %p182 = pneg %p84
      %p183 = pneg %p81
      %p184 = pneg %p110
      %p185 = pneg %p107
      %s186 = smul.u32 2, %s17
      %p187 = scmp.lt.s32.totalorder %s186, 3
      %s188 = scalar_select %p187, %s186, 3
      %s189 = smul.addr %s188, 5
      %s190 = smul.addr %s189, 8
      %s191 = scalar_lea.vmem %s2, %s190
      %s192 = sadd.s32 %s17, %s18
      %p193 = scmp.lt.s32.totalorder %s192, 0
      %s194 = scalar_select %p193, %s192, 0
      %p195 = scmp.lt.s32.totalorder %s194, 0
      %s196 = scalar_select %p195, %s194, 0
      %s197 = smul.addr %s196, 5
      %s198 = smul.addr %s197, 2
      %s199 = scalar_lea.vmem %s0, %s198
      %s200 = sadd.s32 %s17, %s18
      %p201 = scmp.lt.s32.totalorder %s200, 0
      %s202 = scalar_select %p201, %s200, 0
      %s203 = sadd.s32 %s17, %s18
      %p204 = scmp.lt.s32.totalorder %s203, 0
      %s205 = scalar_select %p204, %s203, 0
      %p206 = scmp.lt.s32.totalorder %s205, 0
      %s207 = scalar_select %p206, %s205, 0
      %s208 = smul.addr %s207, 5
      %s209 = smul.addr %s208, 2
      %s210 = scalar_lea.vmem %s1, %s209
      %s211 = sadd.s32 %s17, %s18
      %p212 = scmp.lt.s32.totalorder %s211, 0
      %s213 = scalar_select %p212, %s211, 0
      %s214 = smul.u32 2, %s17
      %p215 = scmp.lt.s32.totalorder %s214, 3
      %s216 = scalar_select %p215, %s214, 3
      %s217 = smul.addr %s216, 5
      %s218 = smul.addr %s217, 8
      %s219 = scalar_lea.vmem %s2, %s218
      %s220 = smul.u32 2, %s17
      %p221 = scmp.eq.s32.totalorder %s18, 0
      // Predicated region
      $region29: #{pallas_loss.1} parent=27 // pred_check
        %p222 = pneg %p221
      $region30: #{pallas_loss.1} parent=27 // pred_check_branch
        %224 = sbr.rel (%p222) target = $region32
      $region31: #{pallas_loss.1} parent=27 // pred_region
        %225 = vst [vmem:[%s219] sm:$0xff] 0.0
        %226 = vst [vmem:[%s219 + $0x8] sm:$0xff] 0.0
        %227 = vst [vmem:[%s219 + $0x10] sm:$0xff] 0.0
        %228 = vst [vmem:[%s219 + $0x18] sm:$0xff] 0.0
        %229 = vst [vmem:[%s219 + $0x20] sm:$0xff] 0.0
        %230 = vst [vmem:[%s219 + $0x28] sm:$0xff] 0.0
        %231 = vst [vmem:[%s219 + $0x30] sm:$0xff] 0.0
        %232 = vst [vmem:[%s219 + $0x38] sm:$0xff] 0.0
        %233 = vst [vmem:[%s219 + $0x40] sm:$0xff] 0.0
        %234 = vst [vmem:[%s219 + $0x48] sm:$0xff] 0.0
      $region32: #{pallas_loss.1} parent=27 // pred_fallthru
        _
      %s235 = sadd.s32 %s17, %s18
      %s236 = smul.u32 %s235, 2
      %p237 = scmp.lt.s32.totalorder %s236, 2
      // Predicated region
      $region33: #{pallas_loss.1} parent=27 // pred_check
        %p238 = pneg %p237
      $region34: #{pallas_loss.1} parent=27 // pred_check_branch
        %240 = sbr.rel (%p238) target = $region36
      $region35: #{pallas_loss.1} parent=27 // pred_region
        %v241 = vld [vmem:[%s199] sm:$0xff]
        %v242 = vld [vmem:[%s199 + $0x8] sm:$0x3]
        %v243 = vld [vmem:[%s210] sm:$0xff]
        %v244 = vld [vmem:[%s210 + $0x8] sm:$0x3]
        %v245 = vlaneseq
        %v246 = vand.u32 %v245, 127
        %v247 = vadd.s32 %v246, 128
        %v248 = vadd.s32 %v246, 256
        %v249 = vadd.s32 %v246, 384
        %v250 = vadd.s32 %v246, 512
        %v251 = vcvt.s32.f32 %v246
        %v252 = vcvt.s32.f32 %v247
        %v253 = vcvt.s32.f32 %v248
        %v254 = vcvt.s32.f32 %v249
        %v255 = vcvt.s32.f32 %v250
        %v256 = vmul.f32 %v251, 0.2
        %v257 = vmul.f32 %v252, 0.2
        %v258 = vmul.f32 %v253, 0.2
        %v259 = vmul.f32 %v254, 0.2
        %v260 = vmul.f32 %v255, 0.2
        %v261 = vadd.f32 %v256, 0.01
        %v262 = vadd.f32 %v257, 0.01
        %v263 = vadd.f32 %v258, 0.01
        %v264 = vadd.f32 %v259, 0.01
        %v265 = vadd.f32 %v260, 0.01
        %v266 = vfloor.f32 %v261
        %v267 = vfloor.f32 %v262
        %v268 = vfloor.f32 %v263
        %v269 = vfloor.f32 %v264
        %v270 = vfloor.f32 %v265
        %v271 = vmul.f32 %v266, 5.0
        %v272 = vmul.f32 %v267, 5.0
        %v273 = vmul.f32 %v268, 5.0
        %v274 = vmul.f32 %v269, 5.0
        %v275 = vmul.f32 %v270, 5.0
        %vm276 = vcmp.eq.f32.partialorder %v271, %v251
        %vm277 = vcmp.eq.f32.partialorder %v272, %v252
        %vm278 = vcmp.eq.f32.partialorder %v273, %v253
        %vm279 = vcmp.eq.f32.partialorder %v274, %v254
        %vm280 = vcmp.eq.f32.partialorder %v275, %v255
        %v281 = vlaneseq
        %v282 = vshrl.u32 %v281, 7
        %v283 = vstv %s236
        %v284 = vadd.s32 %v282, %v283
        %vm285 = vcmp.lt.s32.totalorder %v284, 2
        %v286 = vsel %vm276, 1, 0
        %v287 = vsel %vm277, 1, 0
        %v288 = vsel %vm278, 1, 0
        %v289 = vsel %vm279, 1, 0
        %v290 = vsel %vm280, 1, 0
        %vm291 = vcmp.eq.s32.totalorder %v286, 1
        %vm292 = vcmp.eq.s32.totalorder %v287, 1
        %vm293 = vcmp.eq.s32.totalorder %v288, 1
        %vm294 = vcmp.eq.s32.totalorder %v289, 1
        %vm295 = vcmp.eq.s32.totalorder %v290, 1
        %v296 = vsel %vm285, 1, 0
        %vm297 = vcmp.eq.s32.totalorder %v296, 1
        %vm298 = vmand %vm291, %vm297
        %vm299 = vmand %vm292, %vm297
        %vm300 = vmand %vm293, %vm297
        %vm301 = vmand %vm294, %vm297
        %vm302 = vmand %vm295, %vm297
        %vm303 = vcmp.eq.f32.partialorder %v243, 1.0
        %vm304 = vcmp.eq.f32.partialorder %v244, 1.0
        %v305 = vsel %vm298, 1, 0
        %v306 = vsel %vm299, 1, 0
        %v307 = vsel %vm300, 1, 0
        %v308 = vsel %vm301, 1, 0
        %v309 = vrot.slane %v306, 6
        %v310 = vrot.slane %v307, 4
        %v311 = vrot.slane %v308, 2
        %vm312 = vcmask 1041408
        %v313 = vsel %vm312, %v305, %v309
        %vm314 = vcmask 1045508
        %v315 = vsel %vm314, %v310, %v311
        %vm316 = vcmask 1043456
        %v317 = vsel %vm316, %v313, %v315
        %vm318 = vcmp.ne.s32.totalorder %v317, 0
        %vm319 = vmand %vm303, %vm318
        %vm320 = vmand %vm304, %vm302
        %vm321 = vcmp.eq.f32.partialorder %v243, -1.0
        %vm322 = vcmp.eq.f32.partialorder %v244, -1.0
        %vm323 = vmand %vm321, %vm318
        %vm324 = vmand %vm322, %vm302
        %vm325 = vcmp.eq.f32.partialorder %v243, -2.0
        %vm326 = vcmp.eq.f32.partialorder %v244, -2.0
        %vm327 = vmand %vm325, %vm318
        %vm328 = vmand %vm326, %vm302
        %v329 = vand.u32 2147483647, %v241
        %v330 = vand.u32 2147483647, %v242
        %v331 = vsub.f32 0.0, %v329
        %v332 = vsub.f32 0.0, %v330
        %v333 = vmul.f32 %v331, 1.442695
        %v334 = vpow.pop %v333
        %v335 = vmul.f32 %v332, 1.442695
        %v336 = vpow.pop %v335
        %v337 = vadd.f32 %v334, 1.0
        %v338 = vlog2.pop %v337
        %v339 = vmul.f32 %v338, 0.6931472
        %v340 = vmul.f32 -0.5, %v334
        %v341 = vadd.f32 %v340, 1.0
        %v342 = vmul.f32 %v341, %v334
        %v343 = vand.u32 2147483647, %v334
        %vm344 = vcmp.lt.f32.partialorder %v343, 0.0004427343
        %v345 = vsel %vm344, %v342, %v339
        %v346 = vadd.f32 %v336, 1.0
        %v347 = vlog2.pop %v346
        %v348 = vmul.f32 %v347, 0.6931472
        %v349 = vmul.f32 -0.5, %v336
        %v350 = vadd.f32 %v349, 1.0
        %v351 = vmul.f32 %v350, %v336
        %v352 = vand.u32 2147483647, %v336
        %vm353 = vcmp.lt.f32.partialorder %v352, 0.0004427343
        %v354 = vsel %vm353, %v351, %v348
        %v355 = vmax.f32 %v241, 0.0
        %v356 = vmax.f32 %v242, 0.0
        %v357 = vadd.f32 %v355, %v345
        %v358 = vadd.f32 %v356, %v354
        %v359 = vsub.f32 %v357, %v241
        %v360 = vsub.f32 %v358, %v242
        %vm361 = vcmp.ge.f32.partialorder %v241, 0.0
        %vm362 = vcmp.ge.f32.partialorder %v242, 0.0
        %vm363 = vmxor %vm361, 1
        %vm364 = vmxor %vm362, 1
        %v365 = vsel %vm319, 1.0, 0.0
        %v366 = vsel %vm320, 1.0, 0.0
        %v367 = vsel %vm323, 1.0, 0.0
        %v368 = vsel %vm324, 1.0, 0.0
        %v369 = vsel %vm327, 1.0, 0.0
        %v370 = vsel %vm328, 1.0, 0.0
        %v371 = vsel %vm319, %v359, 0.0
        %v372 = vsel %vm320, %v360, 0.0
        %375 = vst [vmem:[#allocation1] ss:$4 sm:$0xff] %v371
        %s376 = scalar_lea.vmem [#allocation1], 32
        %377 = vst [vmem:[%s376] ss:$4 sm:$0xff] %v372
        %v378 = vld.sshfl [vmem:[#allocation1] sm:$0xff pattern:$0x73625140]
        %v379 = vld.sshfl [vmem:[#allocation1 + $0x8] sm:$0xff pattern:$0x73625140]
        %v380 = vld.sshfl [vmem:[#allocation1 + $0x10] sm:$0xff pattern:$0x73625140]
        %v381 = vld.sshfl [vmem:[#allocation1 + $0x18] sm:$0xff pattern:$0x73625140]
        %v382 = vld.sshfl [vmem:[#allocation1 + $0x20] sm:$0xff pattern:$0x73625140]
        %v388 = vsel %vm312, %v378, 0.0
        %v389 = vrot.slane %v388, 4
        %v390 = vadd.f32 %v388, %v389
        %v391 = vrot.slane %v390, 2
        %v392 = vadd.f32 %v390, %v391
        %v393 = vrot.slane %v392, 1
        %v394 = vadd.f32 %v392, %v393
        %v395 = vsel %vm312, %v379, 0.0
        %v396 = vrot.slane %v395, 4
        %v397 = vadd.f32 %v395, %v396
        %v398 = vrot.slane %v397, 2
        %v399 = vadd.f32 %v397, %v398
        %v400 = vrot.slane %v399, 1
        %v401 = vadd.f32 %v399, %v400
        %v402 = vsel %vm312, %v380, 0.0
        %v403 = vrot.slane %v402, 4
        %v404 = vadd.f32 %v402, %v403
        %v405 = vrot.slane %v404, 2
        %v406 = vadd.f32 %v404, %v405
        %v407 = vrot.slane %v406, 1
        %v408 = vadd.f32 %v406, %v407
        %v409 = vsel %vm312, %v381, 0.0
        %v410 = vrot.slane %v409, 4
        %v411 = vadd.f32 %v409, %v410
        %v412 = vrot.slane %v411, 2
        %v413 = vadd.f32 %v411, %v412
        %v414 = vrot.slane %v413, 1
        %v415 = vadd.f32 %v413, %v414
        %v416 = vsel %vm312, %v382, 0.0
        %v417 = vrot.slane %v416, 4
        %v418 = vadd.f32 %v416, %v417
        %v419 = vrot.slane %v418, 2
        %v420 = vadd.f32 %v418, %v419
        %v421 = vrot.slane %v420, 1
        %v422 = vadd.f32 %v420, %v421
        %425 = vst [vmem:[#allocation1] ss:$4 sm:$0xff] %v365
        %s426 = scalar_lea.vmem [#allocation1], 32
        %427 = vst [vmem:[%s426] ss:$4 sm:$0xff] %v366
        %v428 = vld.sshfl [vmem:[#allocation1] sm:$0xff pattern:$0x73625140]
        %v429 = vld.sshfl [vmem:[#allocation1 + $0x8] sm:$0xff pattern:$0x73625140]
        %v430 = vld.sshfl [vmem:[#allocation1 + $0x10] sm:$0xff pattern:$0x73625140]
        %v431 = vld.sshfl [vmem:[#allocation1 + $0x18] sm:$0xff pattern:$0x73625140]
        %v432 = vld.sshfl [vmem:[#allocation1 + $0x20] sm:$0xff pattern:$0x73625140]
        %v438 = vsel %vm312, %v428, 0.0
        %v439 = vrot.slane %v438, 4
        %v440 = vadd.f32 %v438, %v439
        %v441 = vrot.slane %v440, 2
        %v442 = vadd.f32 %v440, %v441
        %v443 = vrot.slane %v442, 1
        %v444 = vadd.f32 %v442, %v443
        %v445 = vsel %vm312, %v429, 0.0
        %v446 = vrot.slane %v445, 4
        %v447 = vadd.f32 %v445, %v446
        %v448 = vrot.slane %v447, 2
        %v449 = vadd.f32 %v447, %v448
        %v450 = vrot.slane %v449, 1
        %v451 = vadd.f32 %v449, %v450
        %v452 = vsel %vm312, %v430, 0.0
        %v453 = vrot.slane %v452, 4
        %v454 = vadd.f32 %v452, %v453
        %v455 = vrot.slane %v454, 2
        %v456 = vadd.f32 %v454, %v455
        %v457 = vrot.slane %v456, 1
        %v458 = vadd.f32 %v456, %v457
        %v459 = vsel %vm312, %v431, 0.0
        %v460 = vrot.slane %v459, 4
        %v461 = vadd.f32 %v459, %v460
        %v462 = vrot.slane %v461, 2
        %v463 = vadd.f32 %v461, %v462
        %v464 = vrot.slane %v463, 1
        %v465 = vadd.f32 %v463, %v464
        %v466 = vsel %vm312, %v432, 0.0
        %v467 = vrot.slane %v466, 4
        %v468 = vadd.f32 %v466, %v467
        %v469 = vrot.slane %v468, 2
        %v470 = vadd.f32 %v468, %v469
        %v471 = vrot.slane %v470, 1
        %v472 = vadd.f32 %v470, %v471
        %vm473 = vmand %vm319, %vm361
        %vm474 = vmand %vm320, %vm362
        %v475 = vsel %vm473, 1.0, 0.0
        %v476 = vsel %vm474, 1.0, 0.0
        %479 = vst [vmem:[#allocation1] ss:$4 sm:$0xff] %v475
        %s480 = scalar_lea.vmem [#allocation1], 32
        %481 = vst [vmem:[%s480] ss:$4 sm:$0xff] %v476
        %v482 = vld.sshfl [vmem:[#allocation1] sm:$0xff pattern:$0x73625140]
        %v483 = vld.sshfl [vmem:[#allocation1 + $0x8] sm:$0xff pattern:$0x73625140]
        %v484 = vld.sshfl [vmem:[#allocation1 + $0x10] sm:$0xff pattern:$0x73625140]
        %v485 = vld.sshfl [vmem:[#allocation1 + $0x18] sm:$0xff pattern:$0x73625140]
        %v486 = vld.sshfl [vmem:[#allocation1 + $0x20] sm:$0xff pattern:$0x73625140]
        %v492 = vsel %vm312, %v482, 0.0
        %v493 = vrot.slane %v492, 4
        %v494 = vadd.f32 %v492, %v493
        %v495 = vrot.slane %v494, 2
        %v496 = vadd.f32 %v494, %v495
        %v497 = vrot.slane %v496, 1
        %v498 = vadd.f32 %v496, %v497
        %v499 = vsel %vm312, %v483, 0.0
        %v500 = vrot.slane %v499, 4
        %v501 = vadd.f32 %v499, %v500
        %v502 = vrot.slane %v501, 2
        %v503 = vadd.f32 %v501, %v502
        %v504 = vrot.slane %v503, 1
        %v505 = vadd.f32 %v503, %v504
        %v506 = vsel %vm312, %v484, 0.0
        %v507 = vrot.slane %v506, 4
        %v508 = vadd.f32 %v506, %v507
        %v509 = vrot.slane %v508, 2
        %v510 = vadd.f32 %v508, %v509
        %v511 = vrot.slane %v510, 1
        %v512 = vadd.f32 %v510, %v511
        %v513 = vsel %vm312, %v485, 0.0
        %v514 = vrot.slane %v513, 4
        %v515 = vadd.f32 %v513, %v514
        %v516 = vrot.slane %v515, 2
        %v517 = vadd.f32 %v515, %v516
        %v518 = vrot.slane %v517, 1
        %v519 = vadd.f32 %v517, %v518
        %v520 = vsel %vm312, %v486, 0.0
        %v521 = vrot.slane %v520, 4
        %v522 = vadd.f32 %v520, %v521
        %v523 = vrot.slane %v522, 2
        %v524 = vadd.f32 %v522, %v523
        %v525 = vrot.slane %v524, 1
        %v526 = vadd.f32 %v524, %v525
        %v527 = vsel %vm323, %v357, 0.0
        %v528 = vsel %vm324, %v358, 0.0
        %531 = vst [vmem:[#allocation1] ss:$4 sm:$0xff] %v527
        %s532 = scalar_lea.vmem [#allocation1], 32
        %533 = vst [vmem:[%s532] ss:$4 sm:$0xff] %v528
        %v534 = vld.sshfl [vmem:[#allocation1] sm:$0xff pattern:$0x73625140]
        %v535 = vld.sshfl [vmem:[#allocation1 + $0x8] sm:$0xff pattern:$0x73625140]
        %v536 = vld.sshfl [vmem:[#allocation1 + $0x10] sm:$0xff pattern:$0x73625140]
        %v537 = vld.sshfl [vmem:[#allocation1 + $0x18] sm:$0xff pattern:$0x73625140]
        %v538 = vld.sshfl [vmem:[#allocation1 + $0x20] sm:$0xff pattern:$0x73625140]
        %v544 = vsel %vm312, %v534, 0.0
        %v545 = vrot.slane %v544, 4
        %v546 = vadd.f32 %v544, %v545
        %v547 = vrot.slane %v546, 2
        %v548 = vadd.f32 %v546, %v547
        %v549 = vrot.slane %v548, 1
        %v550 = vadd.f32 %v548, %v549
        %v551 = vsel %vm312, %v535, 0.0
        %v552 = vrot.slane %v551, 4
        %v553 = vadd.f32 %v551, %v552
        %v554 = vrot.slane %v553, 2
        %v555 = vadd.f32 %v553, %v554
        %v556 = vrot.slane %v555, 1
        %v557 = vadd.f32 %v555, %v556
        %v558 = vsel %vm312, %v536, 0.0
        %v559 = vrot.slane %v558, 4
        %v560 = vadd.f32 %v558, %v559
        %v561 = vrot.slane %v560, 2
        %v562 = vadd.f32 %v560, %v561
        %v563 = vrot.slane %v562, 1
        %v564 = vadd.f32 %v562, %v563
        %v565 = vsel %vm312, %v537, 0.0
        %v566 = vrot.slane %v565, 4
        %v567 = vadd.f32 %v565, %v566
        %v568 = vrot.slane %v567, 2
        %v569 = vadd.f32 %v567, %v568
        %v570 = vrot.slane %v569, 1
        %v571 = vadd.f32 %v569, %v570
        %v572 = vsel %vm312, %v538, 0.0
        %v573 = vrot.slane %v572, 4
        %v574 = vadd.f32 %v572, %v573
        %v575 = vrot.slane %v574, 2
        %v576 = vadd.f32 %v574, %v575
        %v577 = vrot.slane %v576, 1
        %v578 = vadd.f32 %v576, %v577
        %581 = vst [vmem:[#allocation1] ss:$4 sm:$0xff] %v367
        %s582 = scalar_lea.vmem [#allocation1], 32
        %583 = vst [vmem:[%s582] ss:$4 sm:$0xff] %v368
        %v584 = vld.sshfl [vmem:[#allocation1] sm:$0xff pattern:$0x73625140]
        %v585 = vld.sshfl [vmem:[#allocation1 + $0x8] sm:$0xff pattern:$0x73625140]
        %v586 = vld.sshfl [vmem:[#allocation1 + $0x10] sm:$0xff pattern:$0x73625140]
        %v587 = vld.sshfl [vmem:[#allocation1 + $0x18] sm:$0xff pattern:$0x73625140]
        %v588 = vld.sshfl [vmem:[#allocation1 + $0x20] sm:$0xff pattern:$0x73625140]
        %v594 = vsel %vm312, %v584, 0.0
        %v595 = vrot.slane %v594, 4
        %v596 = vadd.f32 %v594, %v595
        %v597 = vrot.slane %v596, 2
        %v598 = vadd.f32 %v596, %v597
        %v599 = vrot.slane %v598, 1
        %v600 = vadd.f32 %v598, %v599
        %v601 = vsel %vm312, %v585, 0.0
        %v602 = vrot.slane %v601, 4
        %v603 = vadd.f32 %v601, %v602
        %v604 = vrot.slane %v603, 2
        %v605 = vadd.f32 %v603, %v604
        %v606 = vrot.slane %v605, 1
        %v607 = vadd.f32 %v605, %v606
        %v608 = vsel %vm312, %v586, 0.0
        %v609 = vrot.slane %v608, 4
        %v610 = vadd.f32 %v608, %v609
        %v611 = vrot.slane %v610, 2
        %v612 = vadd.f32 %v610, %v611
        %v613 = vrot.slane %v612, 1
        %v614 = vadd.f32 %v612, %v613
        %v615 = vsel %vm312, %v587, 0.0
        %v616 = vrot.slane %v615, 4
        %v617 = vadd.f32 %v615, %v616
        %v618 = vrot.slane %v617, 2
        %v619 = vadd.f32 %v617, %v618
        %v620 = vrot.slane %v619, 1
        %v621 = vadd.f32 %v619, %v620
        %v622 = vsel %vm312, %v588, 0.0
        %v623 = vrot.slane %v622, 4
        %v624 = vadd.f32 %v622, %v623
        %v625 = vrot.slane %v624, 2
        %v626 = vadd.f32 %v624, %v625
        %v627 = vrot.slane %v626, 1
        %v628 = vadd.f32 %v626, %v627
        %vm629 = vmand %vm323, %vm363
        %vm630 = vmand %vm324, %vm364
        %v631 = vsel %vm629, 1.0, 0.0
        %v632 = vsel %vm630, 1.0, 0.0
        %635 = vst [vmem:[#allocation1] ss:$4 sm:$0xff] %v631
        %s636 = scalar_lea.vmem [#allocation1], 32
        %637 = vst [vmem:[%s636] ss:$4 sm:$0xff] %v632
        %v638 = vld.sshfl [vmem:[#allocation1] sm:$0xff pattern:$0x73625140]
        %v639 = vld.sshfl [vmem:[#allocation1 + $0x8] sm:$0xff pattern:$0x73625140]
        %v640 = vld.sshfl [vmem:[#allocation1 + $0x10] sm:$0xff pattern:$0x73625140]
        %v641 = vld.sshfl [vmem:[#allocation1 + $0x18] sm:$0xff pattern:$0x73625140]
        %v642 = vld.sshfl [vmem:[#allocation1 + $0x20] sm:$0xff pattern:$0x73625140]
        %v648 = vsel %vm312, %v638, 0.0
        %v649 = vrot.slane %v648, 4
        %v650 = vadd.f32 %v648, %v649
        %v651 = vrot.slane %v650, 2
        %v652 = vadd.f32 %v650, %v651
        %v653 = vrot.slane %v652, 1
        %v654 = vadd.f32 %v652, %v653
        %v655 = vsel %vm312, %v639, 0.0
        %v656 = vrot.slane %v655, 4
        %v657 = vadd.f32 %v655, %v656
        %v658 = vrot.slane %v657, 2
        %v659 = vadd.f32 %v657, %v658
        %v660 = vrot.slane %v659, 1
        %v661 = vadd.f32 %v659, %v660
        %v662 = vsel %vm312, %v640, 0.0
        %v663 = vrot.slane %v662, 4
        %v664 = vadd.f32 %v662, %v663
        %v665 = vrot.slane %v664, 2
        %v666 = vadd.f32 %v664, %v665
        %v667 = vrot.slane %v666, 1
        %v668 = vadd.f32 %v666, %v667
        %v669 = vsel %vm312, %v641, 0.0
        %v670 = vrot.slane %v669, 4
        %v671 = vadd.f32 %v669, %v670
        %v672 = vrot.slane %v671, 2
        %v673 = vadd.f32 %v671, %v672
        %v674 = vrot.slane %v673, 1
        %v675 = vadd.f32 %v673, %v674
        %v676 = vsel %vm312, %v642, 0.0
        %v677 = vrot.slane %v676, 4
        %v678 = vadd.f32 %v676, %v677
        %v679 = vrot.slane %v678, 2
        %v680 = vadd.f32 %v678, %v679
        %v681 = vrot.slane %v680, 1
        %v682 = vadd.f32 %v680, %v681
        %v683 = vsel %vm327, %v357, 0.0
        %v684 = vsel %vm328, %v358, 0.0
        %687 = vst [vmem:[#allocation1] ss:$4 sm:$0xff] %v683
        %s688 = scalar_lea.vmem [#allocation1], 32
        %689 = vst [vmem:[%s688] ss:$4 sm:$0xff] %v684
        %v690 = vld.sshfl [vmem:[#allocation1] sm:$0xff pattern:$0x73625140]
        %v691 = vld.sshfl [vmem:[#allocation1 + $0x8] sm:$0xff pattern:$0x73625140]
        %v692 = vld.sshfl [vmem:[#allocation1 + $0x10] sm:$0xff pattern:$0x73625140]
        %v693 = vld.sshfl [vmem:[#allocation1 + $0x18] sm:$0xff pattern:$0x73625140]
        %v694 = vld.sshfl [vmem:[#allocation1 + $0x20] sm:$0xff pattern:$0x73625140]
        %v700 = vsel %vm312, %v690, 0.0
        %v701 = vrot.slane %v700, 4
        %v702 = vadd.f32 %v700, %v701
        %v703 = vrot.slane %v702, 2
        %v704 = vadd.f32 %v702, %v703
        %v705 = vrot.slane %v704, 1
        %v706 = vadd.f32 %v704, %v705
        %v707 = vsel %vm312, %v691, 0.0
        %v708 = vrot.slane %v707, 4
        %v709 = vadd.f32 %v707, %v708
        %v710 = vrot.slane %v709, 2
        %v711 = vadd.f32 %v709, %v710
        %v712 = vrot.slane %v711, 1
        %v713 = vadd.f32 %v711, %v712
        %v714 = vsel %vm312, %v692, 0.0
        %v715 = vrot.slane %v714, 4
        %v716 = vadd.f32 %v714, %v715
        %v717 = vrot.slane %v716, 2
        %v718 = vadd.f32 %v716, %v717
        %v719 = vrot.slane %v718, 1
        %v720 = vadd.f32 %v718, %v719
        %v721 = vsel %vm312, %v693, 0.0
        %v722 = vrot.slane %v721, 4
        %v723 = vadd.f32 %v721, %v722
        %v724 = vrot.slane %v723, 2
        %v725 = vadd.f32 %v723, %v724
        %v726 = vrot.slane %v725, 1
        %v727 = vadd.f32 %v725, %v726
        %v728 = vsel %vm312, %v694, 0.0
        %v729 = vrot.slane %v728, 4
        %v730 = vadd.f32 %v728, %v729
        %v731 = vrot.slane %v730, 2
        %v732 = vadd.f32 %v730, %v731
        %v733 = vrot.slane %v732, 1
        %v734 = vadd.f32 %v732, %v733
        %737 = vst [vmem:[#allocation1] ss:$4 sm:$0xff] %v369
        %s738 = scalar_lea.vmem [#allocation1], 32
        %739 = vst [vmem:[%s738] ss:$4 sm:$0xff] %v370
        %v740 = vld.sshfl [vmem:[#allocation1] sm:$0xff pattern:$0x73625140]
        %v741 = vld.sshfl [vmem:[#allocation1 + $0x8] sm:$0xff pattern:$0x73625140]
        %v742 = vld.sshfl [vmem:[#allocation1 + $0x10] sm:$0xff pattern:$0x73625140]
        %v743 = vld.sshfl [vmem:[#allocation1 + $0x18] sm:$0xff pattern:$0x73625140]
        %v744 = vld.sshfl [vmem:[#allocation1 + $0x20] sm:$0xff pattern:$0x73625140]
        %v750 = vsel %vm312, %v740, 0.0
        %v751 = vrot.slane %v750, 4
        %v752 = vadd.f32 %v750, %v751
        %v753 = vrot.slane %v752, 2
        %v754 = vadd.f32 %v752, %v753
        %v755 = vrot.slane %v754, 1
        %v756 = vadd.f32 %v754, %v755
        %v757 = vsel %vm312, %v741, 0.0
        %v758 = vrot.slane %v757, 4
        %v759 = vadd.f32 %v757, %v758
        %v760 = vrot.slane %v759, 2
        %v761 = vadd.f32 %v759, %v760
        %v762 = vrot.slane %v761, 1
        %v763 = vadd.f32 %v761, %v762
        %v764 = vsel %vm312, %v742, 0.0
        %v765 = vrot.slane %v764, 4
        %v766 = vadd.f32 %v764, %v765
        %v767 = vrot.slane %v766, 2
        %v768 = vadd.f32 %v766, %v767
        %v769 = vrot.slane %v768, 1
        %v770 = vadd.f32 %v768, %v769
        %v771 = vsel %vm312, %v743, 0.0
        %v772 = vrot.slane %v771, 4
        %v773 = vadd.f32 %v771, %v772
        %v774 = vrot.slane %v773, 2
        %v775 = vadd.f32 %v773, %v774
        %v776 = vrot.slane %v775, 1
        %v777 = vadd.f32 %v775, %v776
        %v778 = vsel %vm312, %v744, 0.0
        %v779 = vrot.slane %v778, 4
        %v780 = vadd.f32 %v778, %v779
        %v781 = vrot.slane %v780, 2
        %v782 = vadd.f32 %v780, %v781
        %v783 = vrot.slane %v782, 1
        %v784 = vadd.f32 %v782, %v783
        %vm785 = vmand %vm327, %vm363
        %vm786 = vmand %vm328, %vm364
        %v787 = vsel %vm785, 1.0, 0.0
        %v788 = vsel %vm786, 1.0, 0.0
        %791 = vst [vmem:[#allocation1] ss:$4 sm:$0xff] %v787
        %s792 = scalar_lea.vmem [#allocation1], 32
        %793 = vst [vmem:[%s792] ss:$4 sm:$0xff] %v788
        %v794 = vld.sshfl [vmem:[#allocation1] sm:$0xff pattern:$0x73625140]
        %v795 = vld.sshfl [vmem:[#allocation1 + $0x8] sm:$0xff pattern:$0x73625140]
        %v796 = vld.sshfl [vmem:[#allocation1 + $0x10] sm:$0xff pattern:$0x73625140]
        %v797 = vld.sshfl [vmem:[#allocation1 + $0x18] sm:$0xff pattern:$0x73625140]
        %v798 = vld.sshfl [vmem:[#allocation1 + $0x20] sm:$0xff pattern:$0x73625140]
        %v804 = vsel %vm312, %v794, 0.0
        %v805 = vrot.slane %v804, 4
        %v806 = vadd.f32 %v804, %v805
        %v807 = vrot.slane %v806, 2
        %v808 = vadd.f32 %v806, %v807
        %v809 = vrot.slane %v808, 1
        %v810 = vadd.f32 %v808, %v809
        %v811 = vsel %vm312, %v795, 0.0
        %v812 = vrot.slane %v811, 4
        %v813 = vadd.f32 %v811, %v812
        %v814 = vrot.slane %v813, 2
        %v815 = vadd.f32 %v813, %v814
        %v816 = vrot.slane %v815, 1
        %v817 = vadd.f32 %v815, %v816
        %v818 = vsel %vm312, %v796, 0.0
        %v819 = vrot.slane %v818, 4
        %v820 = vadd.f32 %v818, %v819
        %v821 = vrot.slane %v820, 2
        %v822 = vadd.f32 %v820, %v821
        %v823 = vrot.slane %v822, 1
        %v824 = vadd.f32 %v822, %v823
        %v825 = vsel %vm312, %v797, 0.0
        %v826 = vrot.slane %v825, 4
        %v827 = vadd.f32 %v825, %v826
        %v828 = vrot.slane %v827, 2
        %v829 = vadd.f32 %v827, %v828
        %v830 = vrot.slane %v829, 1
        %v831 = vadd.f32 %v829, %v830
        %v832 = vsel %vm312, %v798, 0.0
        %v833 = vrot.slane %v832, 4
        %v834 = vadd.f32 %v832, %v833
        %v835 = vrot.slane %v834, 2
        %v836 = vadd.f32 %v834, %v835
        %v837 = vrot.slane %v836, 1
        %v838 = vadd.f32 %v836, %v837
        %v839 = vsub.f32 %v241, %v243
        %v840 = vsub.f32 %v242, %v244
        %v841 = vand.u32 2147483647, %v839
        %v842 = vand.u32 2147483647, %v840
        %vm843 = vcmp.lt.f32.partialorder %v841, 1.0
        %vm844 = vcmp.lt.f32.partialorder %v842, 1.0
        %v845 = vmul.f32 %v839, 0.5
        %v846 = vmul.f32 %v840, 0.5
        %v847 = vmul.f32 %v845, %v839
        %v848 = vmul.f32 %v846, %v840
        %v849 = vsub.f32 %v841, 0.5
        %v850 = vsub.f32 %v842, 0.5
        %v851 = vsel %vm843, %v847, %v849
        %v852 = vsel %vm844, %v848, %v850
        %853 = vst [vmem:[#allocation1] ss:$4 sm:$0xff] %v365
        %s854 = scalar_lea.vmem [#allocation1], 32
        %855 = vst [vmem:[%s854] ss:$4 sm:$0xff] %v366
        %v856 = vld.sshfl [vmem:[#allocation1] sm:$0xff pattern:$0x73625140]
        %v857 = vld.sshfl [vmem:[#allocation1 + $0x8] sm:$0xff pattern:$0x73625140]
        %v858 = vld.sshfl [vmem:[#allocation1 + $0x10] sm:$0xff pattern:$0x73625140]
        %v859 = vld.sshfl [vmem:[#allocation1 + $0x18] sm:$0xff pattern:$0x73625140]
        %v860 = vld.sshfl [vmem:[#allocation1 + $0x20] sm:$0xff pattern:$0x73625140]
        %866 = vrot.lane.b32.xlu0 %v856, 1
        %v867 = vpop.permute.xlu0 %866
        %868 = vrot.lane.b32.xlu0 %v857, 1
        %v869 = vpop.permute.xlu0 %868
        %870 = vrot.lane.b32.xlu0 %v858, 1
        %v871 = vpop.permute.xlu0 %870
        %872 = vrot.lane.b32.xlu0 %v859, 1
        %v873 = vpop.permute.xlu0 %872
        %874 = vrot.lane.b32.xlu0 %v860, 1
        %v875 = vpop.permute.xlu0 %874
        %vm876 = vcmp.lt.s32.totalorder %v246, 1
        %v877 = vsel %vm876, %v873, %v875
        %v878 = vsel %vm876, %v871, %v873
        %v879 = vsel %vm876, %v869, %v871
        %v880 = vsel %vm876, %v867, %v869
        %v881 = vsel %vm876, %v875, %v867
        %882 = vst [vmem:[#allocation1] ss:$4 sm:$0xff] %v365
        %s883 = scalar_lea.vmem [#allocation1], 32
        %884 = vst [vmem:[%s883] ss:$4 sm:$0xff] %v366
        %v885 = vld.sshfl [vmem:[#allocation1] sm:$0xff pattern:$0x73625140]
        %v886 = vld.sshfl [vmem:[#allocation1 + $0x8] sm:$0xff pattern:$0x73625140]
        %v887 = vld.sshfl [vmem:[#allocation1 + $0x10] sm:$0xff pattern:$0x73625140]
        %v888 = vld.sshfl [vmem:[#allocation1 + $0x18] sm:$0xff pattern:$0x73625140]
        %v889 = vld.sshfl [vmem:[#allocation1 + $0x20] sm:$0xff pattern:$0x73625140]
        %895 = vrot.lane.b32.xlu0 %v885, 2
        %v896 = vpop.permute.xlu0 %895
        %897 = vrot.lane.b32.xlu0 %v886, 2
        %v898 = vpop.permute.xlu0 %897
        %899 = vrot.lane.b32.xlu0 %v887, 2
        %v900 = vpop.permute.xlu0 %899
        %901 = vrot.lane.b32.xlu0 %v888, 2
        %v902 = vpop.permute.xlu0 %901
        %903 = vrot.lane.b32.xlu0 %v889, 2
        %v904 = vpop.permute.xlu0 %903
        %vm905 = vcmp.lt.s32.totalorder %v246, 2
        %v906 = vsel %vm905, %v902, %v904
        %v907 = vsel %vm905, %v900, %v902
        %v908 = vsel %vm905, %v898, %v900
        %v909 = vsel %vm905, %v896, %v898
        %v910 = vsel %vm905, %v904, %v896
        %v911 = vadd.f32 %v881, %v910
        %v912 = vadd.f32 %v880, %v909
        %v913 = vadd.f32 %v879, %v908
        %v914 = vadd.f32 %v878, %v907
        %v915 = vadd.f32 %v877, %v906
        %916 = vst [vmem:[#allocation1] ss:$4 sm:$0xff] %v365
        %s917 = scalar_lea.vmem [#allocation1], 32
        %918 = vst [vmem:[%s917] ss:$4 sm:$0xff] %v366
        %v919 = vld.sshfl [vmem:[#allocation1] sm:$0xff pattern:$0x73625140]
        %v920 = vld.sshfl [vmem:[#allocation1 + $0x8] sm:$0xff pattern:$0x73625140]
        %v921 = vld.sshfl [vmem:[#allocation1 + $0x10] sm:$0xff pattern:$0x73625140]
        %v922 = vld.sshfl [vmem:[#allocation1 + $0x18] sm:$0xff pattern:$0x73625140]
        %v923 = vld.sshfl [vmem:[#allocation1 + $0x20] sm:$0xff pattern:$0x73625140]
        %929 = vrot.lane.b32.xlu0 %v919, 3
        %v930 = vpop.permute.xlu0 %929
        %931 = vrot.lane.b32.xlu0 %v920, 3
        %v932 = vpop.permute.xlu0 %931
        %933 = vrot.lane.b32.xlu0 %v921, 3
        %v934 = vpop.permute.xlu0 %933
        %935 = vrot.lane.b32.xlu0 %v922, 3
        %v936 = vpop.permute.xlu0 %935
        %937 = vrot.lane.b32.xlu0 %v923, 3
        %v938 = vpop.permute.xlu0 %937
        %vm939 = vcmp.lt.s32.totalorder %v246, 3
        %v940 = vsel %vm939, %v936, %v938
        %v941 = vsel %vm939, %v934, %v936
        %v942 = vsel %vm939, %v932, %v934
        %v943 = vsel %vm939, %v930, %v932
        %v944 = vsel %vm939, %v938, %v930
        %v945 = vadd.f32 %v911, %v944
        %v946 = vadd.f32 %v912, %v943
        %v947 = vadd.f32 %v913, %v942
        %v948 = vadd.f32 %v914, %v941
        %v949 = vadd.f32 %v915, %v940
        %950 = vst [vmem:[#allocation1] ss:$4 sm:$0xff] %v365
        %s951 = scalar_lea.vmem [#allocation1], 32
        %952 = vst [vmem:[%s951] ss:$4 sm:$0xff] %v366
        %v953 = vld.sshfl [vmem:[#allocation1] sm:$0xff pattern:$0x73625140]
        %v954 = vld.sshfl [vmem:[#allocation1 + $0x8] sm:$0xff pattern:$0x73625140]
        %v955 = vld.sshfl [vmem:[#allocation1 + $0x10] sm:$0xff pattern:$0x73625140]
        %v956 = vld.sshfl [vmem:[#allocation1 + $0x18] sm:$0xff pattern:$0x73625140]
        %v957 = vld.sshfl [vmem:[#allocation1 + $0x20] sm:$0xff pattern:$0x73625140]
        %963 = vrot.lane.b32.xlu0 %v953, 4
        %v964 = vpop.permute.xlu0 %963
        %965 = vrot.lane.b32.xlu0 %v954, 4
        %v966 = vpop.permute.xlu0 %965
        %967 = vrot.lane.b32.xlu0 %v955, 4
        %v968 = vpop.permute.xlu0 %967
        %969 = vrot.lane.b32.xlu0 %v956, 4
        %v970 = vpop.permute.xlu0 %969
        %971 = vrot.lane.b32.xlu0 %v957, 4
        %v972 = vpop.permute.xlu0 %971
        %vm973 = vcmp.lt.s32.totalorder %v246, 4
        %v974 = vsel %vm973, %v970, %v972
        %v975 = vsel %vm973, %v968, %v970
        %v976 = vsel %vm973, %v966, %v968
        %v977 = vsel %vm973, %v964, %v966
        %v978 = vsel %vm973, %v972, %v964
        %v979 = vadd.f32 %v945, %v978
        %v980 = vadd.f32 %v946, %v977
        %v981 = vadd.f32 %v947, %v976
        %v982 = vadd.f32 %v948, %v975
        %v983 = vadd.f32 %v949, %v974
        %vm984 = vcmp.gt.f32.partialorder %v979, 0.5
        %vm985 = vcmp.gt.f32.partialorder %v980, 0.5
        %vm986 = vcmp.gt.f32.partialorder %v981, 0.5
        %vm987 = vcmp.gt.f32.partialorder %v982, 0.5
        %vm988 = vcmp.gt.f32.partialorder %v983, 0.5
        %991 = vst [vmem:[#allocation1] ss:$4 sm:$0xff] %v851
        %s992 = scalar_lea.vmem [#allocation1], 32
        %993 = vst [vmem:[%s992] ss:$4 sm:$0xff] %v852
        %v994 = vld.sshfl [vmem:[#allocation1] sm:$0xff pattern:$0x73625140]
        %v995 = vld.sshfl [vmem:[#allocation1 + $0x8] sm:$0xff pattern:$0x73625140]
        %v996 = vld.sshfl [vmem:[#allocation1 + $0x10] sm:$0xff pattern:$0x73625140]
        %v997 = vld.sshfl [vmem:[#allocation1 + $0x18] sm:$0xff pattern:$0x73625140]
        %v998 = vld.sshfl [vmem:[#allocation1 + $0x20] sm:$0xff pattern:$0x73625140]
        %v1004 = vsel %vm984, %v994, 0.0
        %v1005 = vsel %vm985, %v995, 0.0
        %v1006 = vsel %vm986, %v996, 0.0
        %v1007 = vsel %vm987, %v997, 0.0
        %v1008 = vsel %vm988, %v998, 0.0
        %v1009 = vsel %vm312, %v1004, 0.0
        %v1010 = vrot.slane %v1009, 4
        %v1011 = vadd.f32 %v1009, %v1010
        %v1012 = vrot.slane %v1011, 2
        %v1013 = vadd.f32 %v1011, %v1012
        %v1014 = vrot.slane %v1013, 1
        %v1015 = vadd.f32 %v1013, %v1014
        %v1016 = vsel %vm312, %v1005, 0.0
        %v1017 = vrot.slane %v1016, 4
        %v1018 = vadd.f32 %v1016, %v1017
        %v1019 = vrot.slane %v1018, 2
        %v1020 = vadd.f32 %v1018, %v1019
        %v1021 = vrot.slane %v1020, 1
        %v1022 = vadd.f32 %v1020, %v1021
        %v1023 = vsel %vm312, %v1006, 0.0
        %v1024 = vrot.slane %v1023, 4
        %v1025 = vadd.f32 %v1023, %v1024
        %v1026 = vrot.slane %v1025, 2
        %v1027 = vadd.f32 %v1025, %v1026
        %v1028 = vrot.slane %v1027, 1
        %v1029 = vadd.f32 %v1027, %v1028
        %v1030 = vsel %vm312, %v1007, 0.0
        %v1031 = vrot.slane %v1030, 4
        %v1032 = vadd.f32 %v1030, %v1031
        %v1033 = vrot.slane %v1032, 2
        %v1034 = vadd.f32 %v1032, %v1033
        %v1035 = vrot.slane %v1034, 1
        %v1036 = vadd.f32 %v1034, %v1035
        %v1037 = vsel %vm312, %v1008, 0.0
        %v1038 = vrot.slane %v1037, 4
        %v1039 = vadd.f32 %v1037, %v1038
        %v1040 = vrot.slane %v1039, 2
        %v1041 = vadd.f32 %v1039, %v1040
        %v1042 = vrot.slane %v1041, 1
        %v1043 = vadd.f32 %v1041, %v1042
        %v1044 = vld [vmem:[%s219] ss:$8 sm:$0xf]
        %v1045 = vld [vmem:[%s219] ss:$8 sm:$0x10]
        %v1046 = vor.u32 %v1044, %v1045
        %v1052 = vrot.slane %v401, 7
        %v1053 = vrot.slane %v408, 6
        %v1054 = vrot.slane %v415, 5
        %v1055 = vrot.slane %v422, 4
        %vm1056 = vcmask 1040384
        %v1057 = vsel %vm1056, %v394, %v1052
        %v1058 = vsel %vm312, %v1057, %v1053
        %vm1059 = vcmask 1043459
        %v1060 = vsel %vm1059, %v1054, %v1055
        %vm1061 = vcmask 1042432
        %v1062 = vsel %vm1061, %v1058, %v1060
        %v1064 = vadd.f32 %v1046, %v1062
        %v1065 = vlaneseq
        %vm1066 = vcmp.ge.s32.totalorder %v1065, 0
        %vm1067 = vcmp.lt.s32.totalorder %v1065, 640
        %vm1068 = vmand %vm1066, %vm1067
        %1069 = vst.msk [vmem:[%s219] ss:$8 sm:$0xf] %vm1068, %v1064
        %1070 = vst.msk [vmem:[%s219] ss:$8 sm:$0x10] %vm1068, %v1064
        %s1071 = scalar_lea.vmem %s219, 1
        %v1072 = vld [vmem:[%s1071] ss:$8 sm:$0xf]
        %v1073 = vld [vmem:[%s1071] ss:$8 sm:$0x10]
        %v1074 = vor.u32 %v1072, %v1073
        %v1080 = vrot.slane %v451, 7
        %v1081 = vrot.slane %v458, 6
        %v1082 = vrot.slane %v465, 5
        %v1083 = vrot.slane %v472, 4
        %v1084 = vsel %vm1056, %v444, %v1080
        %v1085 = vsel %vm312, %v1084, %v1081
        %v1086 = vsel %vm1059, %v1082, %v1083
        %v1087 = vsel %vm1061, %v1085, %v1086
        %v1089 = vadd.f32 %v1074, %v1087
        %1090 = vst.msk [vmem:[%s1071] ss:$8 sm:$0xf] %vm1068, %v1089
        %1091 = vst.msk [vmem:[%s1071] ss:$8 sm:$0x10] %vm1068, %v1089
        %s1092 = scalar_lea.vmem %s219, 2
        %v1093 = vld [vmem:[%s1092] ss:$8 sm:$0xf]
        %v1094 = vld [vmem:[%s1092] ss:$8 sm:$0x10]
        %v1095 = vor.u32 %v1093, %v1094
        %v1101 = vrot.slane %v505, 7
        %v1102 = vrot.slane %v512, 6
        %v1103 = vrot.slane %v519, 5
        %v1104 = vrot.slane %v526, 4
        %v1105 = vsel %vm1056, %v498, %v1101
        %v1106 = vsel %vm312, %v1105, %v1102
        %v1107 = vsel %vm1059, %v1103, %v1104
        %v1108 = vsel %vm1061, %v1106, %v1107
        %v1110 = vadd.f32 %v1095, %v1108
        %1111 = vst.msk [vmem:[%s1092] ss:$8 sm:$0xf] %vm1068, %v1110
        %1112 = vst.msk [vmem:[%s1092] ss:$8 sm:$0x10] %vm1068, %v1110
        %s1113 = scalar_lea.vmem %s219, 3
        %v1114 = vld [vmem:[%s1113] ss:$8 sm:$0xf]
        %v1115 = vld [vmem:[%s1113] ss:$8 sm:$0x10]
        %v1116 = vor.u32 %v1114, %v1115
        %v1122 = vrot.slane %v557, 7
        %v1123 = vrot.slane %v564, 6
        %v1124 = vrot.slane %v571, 5
        %v1125 = vrot.slane %v578, 4
        %v1126 = vsel %vm1056, %v550, %v1122
        %v1127 = vsel %vm312, %v1126, %v1123
        %v1128 = vsel %vm1059, %v1124, %v1125
        %v1129 = vsel %vm1061, %v1127, %v1128
        %v1131 = vadd.f32 %v1116, %v1129
        %1132 = vst.msk [vmem:[%s1113] ss:$8 sm:$0xf] %vm1068, %v1131
        %1133 = vst.msk [vmem:[%s1113] ss:$8 sm:$0x10] %vm1068, %v1131
        %s1134 = scalar_lea.vmem %s219, 4
        %v1135 = vld [vmem:[%s1134] ss:$8 sm:$0xf]
        %v1136 = vld [vmem:[%s1134] ss:$8 sm:$0x10]
        %v1137 = vor.u32 %v1135, %v1136
        %v1143 = vrot.slane %v607, 7
        %v1144 = vrot.slane %v614, 6
        %v1145 = vrot.slane %v621, 5
        %v1146 = vrot.slane %v628, 4
        %v1147 = vsel %vm1056, %v600, %v1143
        %v1148 = vsel %vm312, %v1147, %v1144
        %v1149 = vsel %vm1059, %v1145, %v1146
        %v1150 = vsel %vm1061, %v1148, %v1149
        %v1152 = vadd.f32 %v1137, %v1150
        %1153 = vst.msk [vmem:[%s1134] ss:$8 sm:$0xf] %vm1068, %v1152
        %1154 = vst.msk [vmem:[%s1134] ss:$8 sm:$0x10] %vm1068, %v1152
        %s1155 = scalar_lea.vmem %s219, 5
        %v1156 = vld [vmem:[%s1155] ss:$8 sm:$0xf]
        %v1157 = vld [vmem:[%s1155] ss:$8 sm:$0x10]
        %v1158 = vor.u32 %v1156, %v1157
        %v1164 = vrot.slane %v661, 7
        %v1165 = vrot.slane %v668, 6
        %v1166 = vrot.slane %v675, 5
        %v1167 = vrot.slane %v682, 4
        %v1168 = vsel %vm1056, %v654, %v1164
        %v1169 = vsel %vm312, %v1168, %v1165
        %v1170 = vsel %vm1059, %v1166, %v1167
        %v1171 = vsel %vm1061, %v1169, %v1170
        %v1173 = vadd.f32 %v1158, %v1171
        %1174 = vst.msk [vmem:[%s1155] ss:$8 sm:$0xf] %vm1068, %v1173
        %1175 = vst.msk [vmem:[%s1155] ss:$8 sm:$0x10] %vm1068, %v1173
        %s1176 = scalar_lea.vmem %s219, 6
        %v1177 = vld [vmem:[%s1176] ss:$8 sm:$0xf]
        %v1178 = vld [vmem:[%s1176] ss:$8 sm:$0x10]
        %v1179 = vor.u32 %v1177, %v1178
        %v1185 = vrot.slane %v713, 7
        %v1186 = vrot.slane %v720, 6
        %v1187 = vrot.slane %v727, 5
        %v1188 = vrot.slane %v734, 4
        %v1189 = vsel %vm1056, %v706, %v1185
        %v1190 = vsel %vm312, %v1189, %v1186
        %v1191 = vsel %vm1059, %v1187, %v1188
        %v1192 = vsel %vm1061, %v1190, %v1191
        %v1194 = vadd.f32 %v1179, %v1192
        %1195 = vst.msk [vmem:[%s1176] ss:$8 sm:$0xf] %vm1068, %v1194
        %1196 = vst.msk [vmem:[%s1176] ss:$8 sm:$0x10] %vm1068, %v1194
        %s1197 = scalar_lea.vmem %s219, 7
        %v1198 = vld [vmem:[%s1197] ss:$8 sm:$0xf]
        %v1199 = vld [vmem:[%s1197] ss:$8 sm:$0x10]
        %v1200 = vor.u32 %v1198, %v1199
        %v1206 = vrot.slane %v763, 7
        %v1207 = vrot.slane %v770, 6
        %v1208 = vrot.slane %v777, 5
        %v1209 = vrot.slane %v784, 4
        %v1210 = vsel %vm1056, %v756, %v1206
        %v1211 = vsel %vm312, %v1210, %v1207
        %v1212 = vsel %vm1059, %v1208, %v1209
        %v1213 = vsel %vm1061, %v1211, %v1212
        %v1215 = vadd.f32 %v1200, %v1213
        %1216 = vst.msk [vmem:[%s1197] ss:$8 sm:$0xf] %vm1068, %v1215
        %1217 = vst.msk [vmem:[%s1197] ss:$8 sm:$0x10] %vm1068, %v1215
        %s1218 = scalar_lea.vmem %s219, 40
        %v1219 = vld [vmem:[%s1218] ss:$8 sm:$0xf]
        %v1220 = vld [vmem:[%s1218] ss:$8 sm:$0x10]
        %v1221 = vor.u32 %v1219, %v1220
        %v1227 = vrot.slane %v817, 7
        %v1228 = vrot.slane %v824, 6
        %v1229 = vrot.slane %v831, 5
        %v1230 = vrot.slane %v838, 4
        %v1231 = vsel %vm1056, %v810, %v1227
        %v1232 = vsel %vm312, %v1231, %v1228
        %v1233 = vsel %vm1059, %v1229, %v1230
        %v1234 = vsel %vm1061, %v1232, %v1233
        %v1236 = vadd.f32 %v1221, %v1234
        %1237 = vst.msk [vmem:[%s1218] ss:$8 sm:$0xf] %vm1068, %v1236
        %1238 = vst.msk [vmem:[%s1218] ss:$8 sm:$0x10] %vm1068, %v1236
        %s1239 = scalar_lea.vmem %s219, 41
        %v1240 = vld [vmem:[%s1239] ss:$8 sm:$0xf]
        %v1241 = vld [vmem:[%s1239] ss:$8 sm:$0x10]
        %v1242 = vor.u32 %v1240, %v1241
        %v1248 = vrot.slane %v1022, 7
        %v1249 = vrot.slane %v1029, 6
        %v1250 = vrot.slane %v1036, 5
        %v1251 = vrot.slane %v1043, 4
        %v1252 = vsel %vm1056, %v1015, %v1248
        %v1253 = vsel %vm312, %v1252, %v1249
        %v1254 = vsel %vm1059, %v1250, %v1251
        %v1255 = vsel %vm1061, %v1253, %v1254
        %v1257 = vadd.f32 %v1242, %v1255
        %1258 = vst.msk [vmem:[%s1239] ss:$8 sm:$0xf] %vm1068, %v1257
        %1259 = vst.msk [vmem:[%s1239] ss:$8 sm:$0x10] %vm1068, %v1257
      $region36: #{pallas_loss.1} parent=27 // pred_fallthru
        _
      %s1260 = smul.u32 2, %s17
      %p1261 = scmp.lt.s32.totalorder %s1260, 3
      %s1262 = scalar_select %p1261, %s1260, 3
      %s1263 = smul.addr %s1262, 5
      %s1264 = smul.addr %s1263, 8
      %s1265 = scalar_lea.vmem %s2, %s1264
      // Predicated region
      $region37: #{pallas_loss.1} parent=27 // pred_check
        %p1266 = pneg %p107
      $region38: #{pallas_loss.1} parent=27 // pred_check_branch
        %1268 = sbr.rel (%p1266) target = $region40
      $region39: #{pallas_loss.1} parent=27 // pred_region
        %s1269 = smul.u32 2, %s17
      $region40: #{pallas_loss.1} parent=27 // pred_fallthru
        _
    $region28: #{pallas_loss.1} parent=5 // pred_fallthru
      _
    %p1270 = scmp.le.s32.totalorder 2, %s8
    // Predicated region
    $region41: #{pallas_loss.1} parent=5 // pred_check
      %p1271 = pneg %p1270
    $region42: #{pallas_loss.1} parent=5 // pred_check_branch
      %1273 = sbr.rel (%p1271) target = $region44
    $region43: #{pallas_loss.1} parent=5 // pred_region
      %s1274 = ssub.s32 %s8, 2
      // Predicated region
      $region45: #{pallas_loss.1} parent=43 // pred_check
        %p1275 = pneg %p113
      $region46: #{pallas_loss.1} parent=43 // pred_check_branch
        %1277 = sbr.rel (%p1275) target = $region48
      $region47: #{pallas_loss.1} parent=43 // pred_region
        %s1278 = smul.u32 2, %s19
        %p1279 = scmp.lt.s32.totalorder %s1278, 3
        %s1280 = scalar_select %p1279, %s1278, 3
        %s1281 = smul.addr %s1280, 5
        %s1282 = smul.addr %s1281, 8
        %s1283 = scalar_lea.vmem %s2, %s1282
      $region48: #{pallas_loss.1} parent=43 // pred_fallthru
        _
    $region44: #{pallas_loss.1} parent=5 // pred_fallthru
      _
  $region6: #{pallas_loss.1} parent=0 // loop_footer
    %s12 = sadd.s32 1, %s8
  $region7: #{pallas_loss.1} parent=0 // loop_footer_branch
    %7 = sbr.rel target = $region3
  $region8: #{pallas_loss.1} parent=0 // loop_exit
    _

</llo_original>
